<compile_context>
chip_gen: v6e
topology: v6e:2x2x1
jax: 0.10.0
libtpu: 0.0.40
codegen_flags: <defaults>
</compile_context>

<pallas_src>
import functools

import jax
import jax.numpy as jnp
from jax.experimental import pallas as pl
from jax.experimental.pallas import tpu as pltpu

DIM = 256            # Conv(256, num_classes) inside the module forces dim == 256
NUM_CLASSES = 6
NC_PAD = 8           # classifier head padded to 8 output lanes (>= num_classes)
K = 3
EPS = 1e-5


# ------------------------------ Pallas kernel --------------------------------
def _maf_kernel(xa_ref, xh_ref, dww_ref, pw_ref, bias_ref, cls_ref, out_ref,
                *, compute_dtype):
    # xa_ref  : (1, TH, W+2, C)  bf16  main rows of the zero-padded NHWC input
    # xh_ref  : (1, 2,  W+2, C)  bf16  2-row bottom halo (next rows, same array)
    # dww_ref : (9, C)   cdt    depthwise 3x3 taps, BN1 scale folded in
    # pw_ref  : (C, C)   bf16   pointwise weights, BN2 scale folded into cols
    # bias_ref: (1, C)   f32    b1 @ pw' + b2 (all BN shifts collapsed here)
    # cls_ref : (C, 8)   bf16   classifier weights, zero-padded to 8 lanes
    # out_ref : (1, TH, W, 8)   f32
    TH = out_ref.shape[1]
    W = out_ref.shape[2]
    C = pw_ref.shape[0]
    NC = out_ref.shape[3]
    cdt = compute_dtype

    taps = dww_ref[...]                                       # (9, C) cdt

    # Hoisted kw-shifted column views: 3 sublane-shift relayouts instead of 9.
    # TODO(synk): if the Mosaic dump still shows large relayout copies here,
    # switch the kw shift to pltpu.roll on the sublane axis + an aligned slice.
    cols = [xa_ref[0, :, kw:kw + W, :].astype(cdt) for kw in range(K)]
    xh = xh_ref[0].astype(cdt)                                # (2, W+2, C)

    # ---- depthwise 3x3 main body: output rows [0, TH-2), all taps from xa ---
    acc = cols[0][0:TH - 2, :, :] * taps[0:1, :]
    for kh in range(K):
        for kw in range(K):
            if kh == 0 and kw == 0:
                continue
            acc = acc + (cols[kw][kh:kh + TH - 2, :, :]
                         * taps[kh * K + kw:kh * K + kw + 1, :])

    # ---- depthwise tail: output rows [TH-2, TH) need the 2-row bottom halo --
    tcols = [jnp.concatenate([cols[kw][TH - 2:TH, :, :], xh[:, kw:kw + W, :]],
                             axis=0) for kw in range(K)]      # each (4, W, C)
    acc_t = tcols[0][0:2, :, :] * taps[0:1, :]
    for kh in range(K):
        for kw in range(K):
            if kh == 0 and kw == 0:
                continue
            acc_t = acc_t + (tcols[kw][kh:kh + 2, :, :]
                             * taps[kh * K + kw:kh * K + kw + 1, :])

    pw = pw_ref[...]
    bias = bias_ref[...]
    cls_w = cls_ref[...]

    def head(a, rows):
        # pointwise 1x1 (BN2 scale folded) on the MXU, bf16 in / f32 acc
        t = jnp.dot(a.reshape(rows * W, C).astype(jnp.bfloat16), pw,
                    preferred_element_type=jnp.float32)
        # single collapsed bias (BN1 shift through pointwise + BN2 shift) + ReLU6
        t = jnp.clip(t + bias, 0.0, 6.0)
        # Dropout2d(p=0.0) is the identity -> nothing to do.
        # final 1x1 classifier (6 classes padded to 8 lanes)
        o = jnp.dot(t.astype(jnp.bfloat16), cls_w,
                    preferred_element_type=jnp.float32)
        return o.reshape(rows, W, NC)

    out_ref[0, 0:TH - 2, :, :] = head(acc, TH - 2)
    out_ref[0, TH - 2:TH, :, :] = head(acc_t, 2)


# ------------------------------- wrapper -------------------------------------
def _device_config():
    """(compute_dtype, input-slab byte budget, vmem_limit) per TPU generation."""
    kind = jax.devices()[0].device_kind.lower()
    # bf16 VPU only on v6e / v7x; stay in f32 elementwise math on <=v5 chips.
    f32_vpu = any(t in kind for t in ("v2", "v3", "v4", "v5"))
    cdt = jnp.float32 if f32_vpu else jnp.bfloat16
    # 128-MiB-VMEM generations get bigger row tiles; v7x (64 MiB) / unknown stay tight.
    big_vmem = any(t in kind for t in ("v4", "v5", "v6"))
    slab_bytes = (4 << 20) if big_vmem else (2 << 20)
    vmem_limit = (80 << 20) if big_vmem else (40 << 20)
    return cdt, slab_bytes, vmem_limit


def _pick_tile_h(H, W8, C, slab_bytes):
    """Even row tile >= 4 whose bf16 input slab fits the per-generation budget."""
    row_bytes = (W8 + 2) * C * 2                  # bf16 input row
    cap = slab_bytes // row_bytes - 2
    cap = min(256, max(4, cap - (cap % 2)))
    half = -(-H // 2)
    half = half + (half % 2)                      # >= 2 row tiles (megacore balance)
    return max(4, min(cap, max(4, half)))


@functools.partial(jax.jit, static_argnames=("num_classes",))
def maf_forward(x_nchw, kernel_params, num_classes=NUM_CLASSES):
    """x_nchw: (B, 256, H, W) float32 -> (B, num_classes, H, W) float32."""
    dww, pw, bias, cls_pad = kernel_params
    B, C, H, W = x_nchw.shape
    assert num_classes <= NC_PAD

    cdt, slab_bytes, vmem_limit = _device_config()

    W8 = -(-W // 8) * 8                           # sublane-aligned compute width
    TH = _pick_tile_h(H, W8, C, slab_bytes)
    assert TH % 2 == 0 and TH >= 4, TH            # halo index map relies on even TH
    nH = -(-H // TH)
    H_pad = nH * TH
    halo_blk = TH // 2                            # halo block stride (block = 2 rows)

    # NCHW -> NHWC, cast to bf16 (halves HBM read), zero pad: 1-row/col conv halo
    # plus fill up to H_pad rows / W8 cols.  XLA fuses pad+cast into the transpose.
    x_nhwc = jnp.transpose(x_nchw, (0, 2, 3, 1)).astype(jnp.bfloat16)
    xpad = jnp.pad(x_nhwc, ((0, 0), (1, 1 + H_pad - H), (1, 1 + W8 - W), (0, 0)))

    kernel = functools.partial(_maf_kernel, compute_dtype=cdt)
    # TODO(synk): if xprof still shows exposed input DMA on v5e, bump the main
    # input spec to pipeline_mode=pl.Buffered(3).
    out = pl.pallas_call(
        kernel,
        out_shape=jax.ShapeDtypeStruct((B, H_pad, W8, NC_PAD), jnp.float32),
        grid_spec=pltpu.PrefetchScalarGridSpec(
            num_scalar_prefetch=0,
            grid=(B, nH),
            in_specs=[
                # main rows [t*TH, (t+1)*TH) of the padded image
                pl.BlockSpec((1, TH, W8 + 2, C), lambda b, t: (b, t, 0, 0)),
                # 2-row bottom halo [(t+1)*TH, (t+1)*TH + 2)   (TH is even)
                pl.BlockSpec((1, 2, W8 + 2, C),
                             lambda b, t: (b, (t + 1) * halo_blk, 0, 0)),
                pl.BlockSpec((K * K, C), lambda b, t: (0, 0)),
                pl.BlockSpec((C, C), lambda b, t: (0, 0)),
                pl.BlockSpec((1, C), lambda b, t: (0, 0)),
                pl.BlockSpec((C, NC_PAD), lambda b, t: (0, 0)),
            ],
            out_specs=pl.BlockSpec((1, TH, W8, NC_PAD),
                                   lambda b, t: (b, t, 0, 0)),
        ),
        compiler_params=pltpu.CompilerParams(
            dimension_semantics=("parallel", "parallel"),
            vmem_limit_bytes=vmem_limit,
        ),
    )(xpad, xpad, dww.astype(cdt), pw, bias, cls_pad)

    out = out[:, :H, :W, :num_classes]            # drop fill rows/cols + lane pad
    return jnp.transpose(out, (0, 3, 1, 2))       # NHWC -> NCHW


# ----------------------------- parameter setup --------------------------------
def init_raw_params(key, dim=DIM, num_classes=NUM_CLASSES):
    ks = jax.random.split(key, 11)
    dw = jax.random.normal(ks[0], (dim, 1, K, K), jnp.float32) * 0.2    # depthwise (O,1,3,3)
    g1 = jax.random.uniform(ks[1], (dim,), jnp.float32, 0.5, 1.5)       # BN1 gamma
    be1 = jax.random.normal(ks[2], (dim,), jnp.float32) * 0.1           # BN1 beta
    m1 = jax.random.normal(ks[3], (dim,), jnp.float32) * 0.1            # BN1 running_mean
    v1 = jax.random.uniform(ks[4], (dim,), jnp.float32, 0.5, 1.5)       # BN1 running_var
    pw = jax.random.normal(ks[5], (dim, dim, 1, 1), jnp.float32) * (dim ** -0.5)
    g2 = jax.random.uniform(ks[6], (dim,), jnp.float32, 0.5, 1.5)
    be2 = jax.random.normal(ks[7], (dim,), jnp.float32) * 0.1
    m2 = jax.random.normal(ks[8], (dim,), jnp.float32) * 0.1
    v2 = jax.random.uniform(ks[9], (dim,), jnp.float32, 0.5, 1.5)
    cls = jax.random.normal(ks[10], (num_classes, dim, 1, 1), jnp.float32) * (dim ** -0.5)
    return dw, g1, be1, m1, v1, pw, g2, be2, m2, v2, cls


def fold_params(raw, num_classes=NUM_CLASSES, nc_pad=NC_PAD):
    """Fold BN into the conv weights / a single bias; pre-cast MXU weights to bf16."""
    dw, g1, be1, m1, v1, pw, g2, be2, m2, v2, cls = raw
    dim = dw.shape[0]
    s1 = g1 / jnp.sqrt(v1 + EPS)
    b1 = be1 - m1 * s1
    s2 = g2 / jnp.sqrt(v2 + EPS)
    b2 = be2 - m2 * s2
    # depthwise taps with BN1 scale folded in: (9, C)
    dww = (dw.reshape(dim, K * K) * s1[:, None]).T
    # pointwise (in, out) with BN2 scale folded into output columns
    pw_f = pw[:, :, 0, 0].T * s2[None, :]
    # BN1 shift pushed through the pointwise conv, merged with BN2 shift
    bias = (b1 @ pw_f + b2)[None, :]
    # classifier (in, out), zero-padded to 8 output lanes
    cls_f = cls[:, :, 0, 0].T
    cls_pad = jnp.zeros((dim, nc_pad), jnp.float32).at[:, :num_classes].set(cls_f)
    return (dww.astype(jnp.float32),
            pw_f.astype(jnp.bfloat16),
            bias.astype(jnp.float32),
            cls_pad.astype(jnp.bfloat16))


# ---------------------- pure-JAX reference (for checking) ---------------------
def ref_forward(x, raw):
    dw, g1, be1, m1, v1, pw, g2, be2, m2, v2, cls = raw
    dn = ("NCHW", "OIHW", "NCHW")
    hi = jax.lax.Precision.HIGHEST
    y = jax.lax.conv_general_dilated(x, dw, (1, 1), ((1, 1), (1, 1)),
                                     feature_group_count=dw.shape[0],
                                     dimension_numbers=dn, precision=hi)
    s1 = g1 / jnp.sqrt(v1 + EPS); sh1 = be1 - m1 * s1
    y = y * s1[None, :, None, None] + sh1[None, :, None, None]
    y = jax.lax.conv_general_dilated(y, pw, (1, 1), "VALID",
                                     dimension_numbers=dn, precision=hi)
    s2 = g2 / jnp.sqrt(v2 + EPS); sh2 = be2 - m2 * s2
    y = jnp.clip(y * s2[None, :, None, None] + sh2[None, :, None, None], 0.0, 6.0)
    y = jax.lax.conv_general_dilated(y, cls, (1, 1), "VALID",
                                     dimension_numbers=dn, precision=hi)
    return y


if __name__ == "__main__":
    key = jax.random.PRNGKey(0)
    kx, kp = jax.random.split(key)

    B, H, W = 2, 16, 16
    x = jax.random.normal(kx, (B, DIM, H, W), jnp.float32)

    raw = init_raw_params(kp)
    kparams = fold_params(raw)

    out = jax.block_until_ready(maf_forward(x, kparams))
    assert out.shape == (B, NUM_CLASSES, H, W), out.shape

    ref = jax.block_until_ready(ref_forward(x, raw))
    max_err = float(jnp.max(jnp.abs(out - ref)))
    # bf16 input + bf16 MXU matmuls (and bf16 depthwise on v6e/v7x) vs an
    # f32 HIGHEST-precision reference.
    cdt, _, _ = _device_config()
    tol = 6e-2 if cdt == jnp.bfloat16 else 4e-2
    assert max_err < tol, f"max abs err {max_err}"

    print("KERNEL_OK")
</pallas_src>

<mosaic_0001>
module attributes {stable_mosaic.version = 11 : i64} {
  func.func @_maf_kernel(%arg0: i32, %arg1: i32, %arg2: memref<1x8x18x256xbf16, #tpu.memory_space<vmem>>, %arg3: memref<1x2x18x256xbf16, #tpu.memory_space<vmem>>, %arg4: memref<9x256xbf16, #tpu.memory_space<vmem>>, %arg5: memref<256x256xbf16, #tpu.memory_space<vmem>>, %arg6: memref<1x256xf32, #tpu.memory_space<vmem>>, %arg7: memref<256x8xbf16, #tpu.memory_space<vmem>>, %arg8: memref<1x8x16x8xf32, #tpu.memory_space<vmem>>) attributes {dimension_semantics = [#tpu.dimension_semantics<parallel>, #tpu.dimension_semantics<parallel>], iteration_bounds = array<i64: 2, 2>, scalar_prefetch = 0 : i64, scratch_operands = 0 : i64, tpu.core_type = #tpu.core_type<tc>, window_params = [{transform_indices = @transform_0, window_bounds = array<i64: 1, 8, 18, 256>}, {transform_indices = @transform_1, window_bounds = array<i64: 1, 2, 18, 256>}, {pipeline_mode = #tpu.pipeline_mode<synchronous>, transform_indices = @transform_2, window_bounds = array<i64: 9, 256>}, {pipeline_mode = #tpu.pipeline_mode<synchronous>, transform_indices = @transform_3, window_bounds = array<i64: 256, 256>}, {pipeline_mode = #tpu.pipeline_mode<synchronous>, transform_indices = @transform_4, window_bounds = array<i64: 1, 256>}, {pipeline_mode = #tpu.pipeline_mode<synchronous>, transform_indices = @transform_5, window_bounds = array<i64: 256, 8>}, {transform_indices = @transform_6, window_bounds = array<i64: 1, 8, 16, 8>}]} {
    %c0 = arith.constant 0 : index
    %c0_0 = arith.constant 0 : index
    %0 = vector.load %arg4[%c0, %c0_0] : memref<9x256xbf16, #tpu.memory_space<vmem>>, vector<9x256xbf16>
    %c0_1 = arith.constant 0 : index
    %c0_2 = arith.constant 0 : index
    %c0_3 = arith.constant 0 : index
    %c0_4 = arith.constant 0 : index
    %1 = vector.load %arg2[%c0_1, %c0_2, %c0_3, %c0_4] : memref<1x8x18x256xbf16, #tpu.memory_space<vmem>>, vector<1x8x16x256xbf16>
    %2 = vector.shape_cast %1 : vector<1x8x16x256xbf16> to vector<8x16x256xbf16>
    %c0_5 = arith.constant 0 : index
    %c0_6 = arith.constant 0 : index
    %c1 = arith.constant 1 : index
    %c0_7 = arith.constant 0 : index
    %3 = vector.load %arg2[%c0_5, %c0_6, %c1, %c0_7] : memref<1x8x18x256xbf16, #tpu.memory_space<vmem>>, vector<1x8x16x256xbf16>
    %4 = vector.shape_cast %3 : vector<1x8x16x256xbf16> to vector<8x16x256xbf16>
    %c0_8 = arith.constant 0 : index
    %c0_9 = arith.constant 0 : index
    %c2 = arith.constant 2 : index
    %c0_10 = arith.constant 0 : index
    %5 = vector.load %arg2[%c0_8, %c0_9, %c2, %c0_10] : memref<1x8x18x256xbf16, #tpu.memory_space<vmem>>, vector<1x8x16x256xbf16>
    %6 = vector.shape_cast %5 : vector<1x8x16x256xbf16> to vector<8x16x256xbf16>
    %c0_11 = arith.constant 0 : index
    %c0_12 = arith.constant 0 : index
    %c0_13 = arith.constant 0 : index
    %c0_14 = arith.constant 0 : index
    %7 = vector.load %arg3[%c0_11, %c0_12, %c0_13, %c0_14] : memref<1x2x18x256xbf16, #tpu.memory_space<vmem>>, vector<1x2x18x256xbf16>
    %8 = vector.shape_cast %7 : vector<1x2x18x256xbf16> to vector<2x18x256xbf16>
    %9 = vector.extract_strided_slice %2 {offsets = [0, 0, 0], sizes = [6, 16, 256], strides = [1, 1, 1]} : vector<8x16x256xbf16> to vector<6x16x256xbf16>
    %10 = vector.extract_strided_slice %0 {offsets = [0, 0], sizes = [1, 256], strides = [1, 1]} : vector<9x256xbf16> to vector<1x256xbf16>
    %11 = vector.shape_cast %10 : vector<1x256xbf16> to vector<1x1x256xbf16>
    %12 = vector.broadcast %11 : vector<1x1x256xbf16> to vector<6x16x256xbf16>
    %13 = arith.mulf %9, %12 : vector<6x16x256xbf16>
    %14 = vector.extract_strided_slice %4 {offsets = [0, 0, 0], sizes = [6, 16, 256], strides = [1, 1, 1]} : vector<8x16x256xbf16> to vector<6x16x256xbf16>
    %15 = vector.extract_strided_slice %0 {offsets = [1, 0], sizes = [1, 256], strides = [1, 1]} : vector<9x256xbf16> to vector<1x256xbf16>
    %16 = vector.shape_cast %15 : vector<1x256xbf16> to vector<1x1x256xbf16>
    %17 = vector.broadcast %16 : vector<1x1x256xbf16> to vector<6x16x256xbf16>
    %18 = arith.mulf %14, %17 : vector<6x16x256xbf16>
    %19 = arith.addf %13, %18 : vector<6x16x256xbf16>
    %20 = vector.extract_strided_slice %6 {offsets = [0, 0, 0], sizes = [6, 16, 256], strides = [1, 1, 1]} : vector<8x16x256xbf16> to vector<6x16x256xbf16>
    %21 = vector.extract_strided_slice %0 {offsets = [2, 0], sizes = [1, 256], strides = [1, 1]} : vector<9x256xbf16> to vector<1x256xbf16>
    %22 = vector.shape_cast %21 : vector<1x256xbf16> to vector<1x1x256xbf16>
    %23 = vector.broadcast %22 : vector<1x1x256xbf16> to vector<6x16x256xbf16>
    %24 = arith.mulf %20, %23 : vector<6x16x256xbf16>
    %25 = arith.addf %19, %24 : vector<6x16x256xbf16>
    %26 = vector.extract_strided_slice %2 {offsets = [1, 0, 0], sizes = [6, 16, 256], strides = [1, 1, 1]} : vector<8x16x256xbf16> to vector<6x16x256xbf16>
    %27 = vector.extract_strided_slice %0 {offsets = [3, 0], sizes = [1, 256], strides = [1, 1]} : vector<9x256xbf16> to vector<1x256xbf16>
    %28 = vector.shape_cast %27 : vector<1x256xbf16> to vector<1x1x256xbf16>
    %29 = vector.broadcast %28 : vector<1x1x256xbf16> to vector<6x16x256xbf16>
    %30 = arith.mulf %26, %29 : vector<6x16x256xbf16>
    %31 = arith.addf %25, %30 : vector<6x16x256xbf16>
    %32 = vector.extract_strided_slice %4 {offsets = [1, 0, 0], sizes = [6, 16, 256], strides = [1, 1, 1]} : vector<8x16x256xbf16> to vector<6x16x256xbf16>
    %33 = vector.extract_strided_slice %0 {offsets = [4, 0], sizes = [1, 256], strides = [1, 1]} : vector<9x256xbf16> to vector<1x256xbf16>
    %34 = vector.shape_cast %33 : vector<1x256xbf16> to vector<1x1x256xbf16>
    %35 = vector.broadcast %34 : vector<1x1x256xbf16> to vector<6x16x256xbf16>
    %36 = arith.mulf %32, %35 : vector<6x16x256xbf16>
    %37 = arith.addf %31, %36 : vector<6x16x256xbf16>
    %38 = vector.extract_strided_slice %6 {offsets = [1, 0, 0], sizes = [6, 16, 256], strides = [1, 1, 1]} : vector<8x16x256xbf16> to vector<6x16x256xbf16>
    %39 = vector.extract_strided_slice %0 {offsets = [5, 0], sizes = [1, 256], strides = [1, 1]} : vector<9x256xbf16> to vector<1x256xbf16>
    %40 = vector.shape_cast %39 : vector<1x256xbf16> to vector<1x1x256xbf16>
    %41 = vector.broadcast %40 : vector<1x1x256xbf16> to vector<6x16x256xbf16>
    %42 = arith.mulf %38, %41 : vector<6x16x256xbf16>
    %43 = arith.addf %37, %42 : vector<6x16x256xbf16>
    %44 = vector.extract_strided_slice %2 {offsets = [2, 0, 0], sizes = [6, 16, 256], strides = [1, 1, 1]} : vector<8x16x256xbf16> to vector<6x16x256xbf16>
    %45 = vector.extract_strided_slice %0 {offsets = [6, 0], sizes = [1, 256], strides = [1, 1]} : vector<9x256xbf16> to vector<1x256xbf16>
    %46 = vector.shape_cast %45 : vector<1x256xbf16> to vector<1x1x256xbf16>
    %47 = vector.broadcast %46 : vector<1x1x256xbf16> to vector<6x16x256xbf16>
    %48 = arith.mulf %44, %47 : vector<6x16x256xbf16>
    %49 = arith.addf %43, %48 : vector<6x16x256xbf16>
    %50 = vector.extract_strided_slice %4 {offsets = [2, 0, 0], sizes = [6, 16, 256], strides = [1, 1, 1]} : vector<8x16x256xbf16> to vector<6x16x256xbf16>
    %51 = vector.extract_strided_slice %0 {offsets = [7, 0], sizes = [1, 256], strides = [1, 1]} : vector<9x256xbf16> to vector<1x256xbf16>
    %52 = vector.shape_cast %51 : vector<1x256xbf16> to vector<1x1x256xbf16>
    %53 = vector.broadcast %52 : vector<1x1x256xbf16> to vector<6x16x256xbf16>
    %54 = arith.mulf %50, %53 : vector<6x16x256xbf16>
    %55 = arith.addf %49, %54 : vector<6x16x256xbf16>
    %56 = vector.extract_strided_slice %6 {offsets = [2, 0, 0], sizes = [6, 16, 256], strides = [1, 1, 1]} : vector<8x16x256xbf16> to vector<6x16x256xbf16>
    %57 = vector.extract_strided_slice %0 {offsets = [8, 0], sizes = [1, 256], strides = [1, 1]} : vector<9x256xbf16> to vector<1x256xbf16>
    %58 = vector.shape_cast %57 : vector<1x256xbf16> to vector<1x1x256xbf16>
    %59 = vector.broadcast %58 : vector<1x1x256xbf16> to vector<6x16x256xbf16>
    %60 = arith.mulf %56, %59 : vector<6x16x256xbf16>
    %61 = arith.addf %55, %60 : vector<6x16x256xbf16>
    %62 = vector.extract_strided_slice %2 {offsets = [6, 0, 0], sizes = [2, 16, 256], strides = [1, 1, 1]} : vector<8x16x256xbf16> to vector<2x16x256xbf16>
    %63 = vector.extract_strided_slice %8 {offsets = [0, 0, 0], sizes = [2, 16, 256], strides = [1, 1, 1]} : vector<2x18x256xbf16> to vector<2x16x256xbf16>
    %64 = tpu.concatenate %62, %63 in 0 : vector<2x16x256xbf16>, vector<2x16x256xbf16> -> vector<4x16x256xbf16>
    %65 = vector.extract_strided_slice %4 {offsets = [6, 0, 0], sizes = [2, 16, 256], strides = [1, 1, 1]} : vector<8x16x256xbf16> to vector<2x16x256xbf16>
    %66 = vector.extract_strided_slice %8 {offsets = [0, 1, 0], sizes = [2, 16, 256], strides = [1, 1, 1]} : vector<2x18x256xbf16> to vector<2x16x256xbf16>
    %67 = tpu.concatenate %65, %66 in 0 : vector<2x16x256xbf16>, vector<2x16x256xbf16> -> vector<4x16x256xbf16>
    %68 = vector.extract_strided_slice %6 {offsets = [6, 0, 0], sizes = [2, 16, 256], strides = [1, 1, 1]} : vector<8x16x256xbf16> to vector<2x16x256xbf16>
    %69 = vector.extract_strided_slice %8 {offsets = [0, 2, 0], sizes = [2, 16, 256], strides = [1, 1, 1]} : vector<2x18x256xbf16> to vector<2x16x256xbf16>
    %70 = tpu.concatenate %68, %69 in 0 : vector<2x16x256xbf16>, vector<2x16x256xbf16> -> vector<4x16x256xbf16>
    %71 = vector.extract_strided_slice %64 {offsets = [0, 0, 0], sizes = [2, 16, 256], strides = [1, 1, 1]} : vector<4x16x256xbf16> to vector<2x16x256xbf16>
    %72 = vector.extract_strided_slice %0 {offsets = [0, 0], sizes = [1, 256], strides = [1, 1]} : vector<9x256xbf16> to vector<1x256xbf16>
    %73 = vector.shape_cast %72 : vector<1x256xbf16> to vector<1x1x256xbf16>
    %74 = vector.broadcast %73 : vector<1x1x256xbf16> to vector<2x16x256xbf16>
    %75 = arith.mulf %71, %74 : vector<2x16x256xbf16>
    %76 = vector.extract_strided_slice %67 {offsets = [0, 0, 0], sizes = [2, 16, 256], strides = [1, 1, 1]} : vector<4x16x256xbf16> to vector<2x16x256xbf16>
    %77 = vector.extract_strided_slice %0 {offsets = [1, 0], sizes = [1, 256], strides = [1, 1]} : vector<9x256xbf16> to vector<1x256xbf16>
    %78 = vector.shape_cast %77 : vector<1x256xbf16> to vector<1x1x256xbf16>
    %79 = vector.broadcast %78 : vector<1x1x256xbf16> to vector<2x16x256xbf16>
    %80 = arith.mulf %76, %79 : vector<2x16x256xbf16>
    %81 = arith.addf %75, %80 : vector<2x16x256xbf16>
    %82 = vector.extract_strided_slice %70 {offsets = [0, 0, 0], sizes = [2, 16, 256], strides = [1, 1, 1]} : vector<4x16x256xbf16> to vector<2x16x256xbf16>
    %83 = vector.extract_strided_slice %0 {offsets = [2, 0], sizes = [1, 256], strides = [1, 1]} : vector<9x256xbf16> to vector<1x256xbf16>
    %84 = vector.shape_cast %83 : vector<1x256xbf16> to vector<1x1x256xbf16>
    %85 = vector.broadcast %84 : vector<1x1x256xbf16> to vector<2x16x256xbf16>
    %86 = arith.mulf %82, %85 : vector<2x16x256xbf16>
    %87 = arith.addf %81, %86 : vector<2x16x256xbf16>
    %88 = vector.extract_strided_slice %64 {offsets = [1, 0, 0], sizes = [2, 16, 256], strides = [1, 1, 1]} : vector<4x16x256xbf16> to vector<2x16x256xbf16>
    %89 = vector.extract_strided_slice %0 {offsets = [3, 0], sizes = [1, 256], strides = [1, 1]} : vector<9x256xbf16> to vector<1x256xbf16>
    %90 = vector.shape_cast %89 : vector<1x256xbf16> to vector<1x1x256xbf16>
    %91 = vector.broadcast %90 : vector<1x1x256xbf16> to vector<2x16x256xbf16>
    %92 = arith.mulf %88, %91 : vector<2x16x256xbf16>
    %93 = arith.addf %87, %92 : vector<2x16x256xbf16>
    %94 = vector.extract_strided_slice %67 {offsets = [1, 0, 0], sizes = [2, 16, 256], strides = [1, 1, 1]} : vector<4x16x256xbf16> to vector<2x16x256xbf16>
    %95 = vector.extract_strided_slice %0 {offsets = [4, 0], sizes = [1, 256], strides = [1, 1]} : vector<9x256xbf16> to vector<1x256xbf16>
    %96 = vector.shape_cast %95 : vector<1x256xbf16> to vector<1x1x256xbf16>
    %97 = vector.broadcast %96 : vector<1x1x256xbf16> to vector<2x16x256xbf16>
    %98 = arith.mulf %94, %97 : vector<2x16x256xbf16>
    %99 = arith.addf %93, %98 : vector<2x16x256xbf16>
    %100 = vector.extract_strided_slice %70 {offsets = [1, 0, 0], sizes = [2, 16, 256], strides = [1, 1, 1]} : vector<4x16x256xbf16> to vector<2x16x256xbf16>
    %101 = vector.extract_strided_slice %0 {offsets = [5, 0], sizes = [1, 256], strides = [1, 1]} : vector<9x256xbf16> to vector<1x256xbf16>
    %102 = vector.shape_cast %101 : vector<1x256xbf16> to vector<1x1x256xbf16>
    %103 = vector.broadcast %102 : vector<1x1x256xbf16> to vector<2x16x256xbf16>
    %104 = arith.mulf %100, %103 : vector<2x16x256xbf16>
    %105 = arith.addf %99, %104 : vector<2x16x256xbf16>
    %106 = vector.extract_strided_slice %64 {offsets = [2, 0, 0], sizes = [2, 16, 256], strides = [1, 1, 1]} : vector<4x16x256xbf16> to vector<2x16x256xbf16>
    %107 = vector.extract_strided_slice %0 {offsets = [6, 0], sizes = [1, 256], strides = [1, 1]} : vector<9x256xbf16> to vector<1x256xbf16>
    %108 = vector.shape_cast %107 : vector<1x256xbf16> to vector<1x1x256xbf16>
    %109 = vector.broadcast %108 : vector<1x1x256xbf16> to vector<2x16x256xbf16>
    %110 = arith.mulf %106, %109 : vector<2x16x256xbf16>
    %111 = arith.addf %105, %110 : vector<2x16x256xbf16>
    %112 = vector.extract_strided_slice %67 {offsets = [2, 0, 0], sizes = [2, 16, 256], strides = [1, 1, 1]} : vector<4x16x256xbf16> to vector<2x16x256xbf16>
    %113 = vector.extract_strided_slice %0 {offsets = [7, 0], sizes = [1, 256], strides = [1, 1]} : vector<9x256xbf16> to vector<1x256xbf16>
    %114 = vector.shape_cast %113 : vector<1x256xbf16> to vector<1x1x256xbf16>
    %115 = vector.broadcast %114 : vector<1x1x256xbf16> to vector<2x16x256xbf16>
    %116 = arith.mulf %112, %115 : vector<2x16x256xbf16>
    %117 = arith.addf %111, %116 : vector<2x16x256xbf16>
    %118 = vector.extract_strided_slice %70 {offsets = [2, 0, 0], sizes = [2, 16, 256], strides = [1, 1, 1]} : vector<4x16x256xbf16> to vector<2x16x256xbf16>
    %119 = vector.extract_strided_slice %0 {offsets = [8, 0], sizes = [1, 256], strides = [1, 1]} : vector<9x256xbf16> to vector<1x256xbf16>
    %120 = vector.shape_cast %119 : vector<1x256xbf16> to vector<1x1x256xbf16>
    %121 = vector.broadcast %120 : vector<1x1x256xbf16> to vector<2x16x256xbf16>
    %122 = arith.mulf %118, %121 : vector<2x16x256xbf16>
    %123 = arith.addf %117, %122 : vector<2x16x256xbf16>
    %c0_15 = arith.constant 0 : index
    %c0_16 = arith.constant 0 : index
    %124 = vector.load %arg5[%c0_15, %c0_16] : memref<256x256xbf16, #tpu.memory_space<vmem>>, vector<256x256xbf16>
    %c0_17 = arith.constant 0 : index
    %c0_18 = arith.constant 0 : index
    %125 = vector.load %arg6[%c0_17, %c0_18] : memref<1x256xf32, #tpu.memory_space<vmem>>, vector<1x256xf32>
    %c0_19 = arith.constant 0 : index
    %c0_20 = arith.constant 0 : index
    %126 = vector.load %arg7[%c0_19, %c0_20] : memref<256x8xbf16, #tpu.memory_space<vmem>>, vector<256x8xbf16>
    %127 = vector.shape_cast %61 : vector<6x16x256xbf16> to vector<96x256xbf16>
    %cst = arith.constant dense<0.000000e+00> : vector<96x256xf32>
    %128 = tpu.matmul %127, %124, %cst {dimension_numbers = #tpu.dot_dimension_numbers<[1], [0], [0], [1], [0, 0, 1, 1], [], []>} : vector<96x256xbf16>, vector<256x256xbf16>, vector<96x256xf32> -> vector<96x256xf32>
    %129 = vector.broadcast %125 : vector<1x256xf32> to vector<96x256xf32>
    %130 = arith.addf %128, %129 : vector<96x256xf32>
    %cst_21 = arith.constant 0.000000e+00 : f32
    %cst_22 = arith.constant 6.000000e+00 : f32
    %131 = vector.broadcast %cst_21 : f32 to vector<96x256xf32>
    %132 = arith.maximumf %131, %130 : vector<96x256xf32>
    %133 = vector.broadcast %cst_22 : f32 to vector<96x256xf32>
    %134 = arith.minimumf %133, %132 : vector<96x256xf32>
    %135 = arith.truncf %134 : vector<96x256xf32> to vector<96x256xbf16>
    %cst_23 = arith.constant dense<0.000000e+00> : vector<96x8xf32>
    %136 = tpu.matmul %135, %126, %cst_23 {dimension_numbers = #tpu.dot_dimension_numbers<[1], [0], [0], [1], [0, 0, 1, 1], [], []>} : vector<96x256xbf16>, vector<256x8xbf16>, vector<96x8xf32> -> vector<96x8xf32>
    %137 = vector.shape_cast %136 : vector<96x8xf32> to vector<6x16x8xf32>
    %c0_24 = arith.constant 0 : index
    %c0_25 = arith.constant 0 : index
    %c0_26 = arith.constant 0 : index
    %c0_27 = arith.constant 0 : index
    %138 = vector.load %arg8[%c0_24, %c0_25, %c0_26, %c0_27] : memref<1x8x16x8xf32, #tpu.memory_space<vmem>>, vector<1x6x16x8xf32>
    %139 = vector.shape_cast %138 : vector<1x6x16x8xf32> to vector<6x16x8xf32>
    %140 = vector.shape_cast %137 : vector<6x16x8xf32> to vector<1x6x16x8xf32>
    tpu.vector_store %arg8[%c0_24, %c0_25, %c0_26, %c0_27], %140 {strides = array<i32>} : memref<1x8x16x8xf32, #tpu.memory_space<vmem>>, vector<1x6x16x8xf32>,
    %141 = vector.shape_cast %123 : vector<2x16x256xbf16> to vector<32x256xbf16>
    %cst_28 = arith.constant dense<0.000000e+00> : vector<32x256xf32>
    %142 = tpu.matmul %141, %124, %cst_28 {dimension_numbers = #tpu.dot_dimension_numbers<[1], [0], [0], [1], [0, 0, 1, 1], [], []>} : vector<32x256xbf16>, vector<256x256xbf16>, vector<32x256xf32> -> vector<32x256xf32>
    %143 = vector.broadcast %125 : vector<1x256xf32> to vector<32x256xf32>
    %144 = arith.addf %142, %143 : vector<32x256xf32>
    %cst_29 = arith.constant 0.000000e+00 : f32
    %cst_30 = arith.constant 6.000000e+00 : f32
    %145 = vector.broadcast %cst_29 : f32 to vector<32x256xf32>
    %146 = arith.maximumf %145, %144 : vector<32x256xf32>
    %147 = vector.broadcast %cst_30 : f32 to vector<32x256xf32>
    %148 = arith.minimumf %147, %146 : vector<32x256xf32>
    %149 = arith.truncf %148 : vector<32x256xf32> to vector<32x256xbf16>
    %cst_31 = arith.constant dense<0.000000e+00> : vector<32x8xf32>
    %150 = tpu.matmul %149, %126, %cst_31 {dimension_numbers = #tpu.dot_dimension_numbers<[1], [0], [0], [1], [0, 0, 1, 1], [], []>} : vector<32x256xbf16>, vector<256x8xbf16>, vector<32x8xf32> -> vector<32x8xf32>
    %151 = vector.shape_cast %150 : vector<32x8xf32> to vector<2x16x8xf32>
    %c0_32 = arith.constant 0 : index
    %c6 = arith.constant 6 : index
    %c0_33 = arith.constant 0 : index
    %c0_34 = arith.constant 0 : index
    %152 = vector.load %arg8[%c0_32, %c6, %c0_33, %c0_34] : memref<1x8x16x8xf32, #tpu.memory_space<vmem>>, vector<1x2x16x8xf32>
    %153 = vector.shape_cast %152 : vector<1x2x16x8xf32> to vector<2x16x8xf32>
    %154 = vector.shape_cast %151 : vector<2x16x8xf32> to vector<1x2x16x8xf32>
    tpu.vector_store %arg8[%c0_32, %c6, %c0_33, %c0_34], %154 {strides = array<i32>} : memref<1x8x16x8xf32, #tpu.memory_space<vmem>>, vector<1x2x16x8xf32>,
    return
  }
  func.func @transform_0(%arg0: i32, %arg1: i32) -> (i32, i32, i32, i32) {
    %c0_i32 = arith.constant 0 : i32
    %c0_i32_0 = arith.constant 0 : i32
    %c0_i32_1 = arith.constant 0 : i32
    return %arg0, %arg1, %c0_i32, %c0_i32_0 : i32, i32, i32, i32
  }
  func.func @transform_1(%arg0: i32, %arg1: i32) -> (i32, i32, i32, i32) {
    %c1_i32 = arith.constant 1 : i32
    %0 = arith.addi %arg1, %c1_i32 : i32
    %c4_i32 = arith.constant 4 : i32
    %1 = arith.muli %0, %c4_i32 : i32
    %c0_i32 = arith.constant 0 : i32
    %c0_i32_0 = arith.constant 0 : i32
    %c0_i32_1 = arith.constant 0 : i32
    return %arg0, %1, %c0_i32, %c0_i32_0 : i32, i32, i32, i32
  }
  func.func @transform_2(%arg0: i32, %arg1: i32) -> (i32, i32) {
    %c0_i32 = arith.constant 0 : i32
    %c0_i32_0 = arith.constant 0 : i32
    %c0_i32_1 = arith.constant 0 : i32
    return %c0_i32, %c0_i32_0 : i32, i32
  }
  func.func @transform_3(%arg0: i32, %arg1: i32) -> (i32, i32) {
    %c0_i32 = arith.constant 0 : i32
    %c0_i32_0 = arith.constant 0 : i32
    %c0_i32_1 = arith.constant 0 : i32
    return %c0_i32, %c0_i32_0 : i32, i32
  }
  func.func @transform_4(%arg0: i32, %arg1: i32) -> (i32, i32) {
    %c0_i32 = arith.constant 0 : i32
    %c0_i32_0 = arith.constant 0 : i32
    %c0_i32_1 = arith.constant 0 : i32
    return %c0_i32, %c0_i32_0 : i32, i32
  }
  func.func @transform_5(%arg0: i32, %arg1: i32) -> (i32, i32) {
    %c0_i32 = arith.constant 0 : i32
    %c0_i32_0 = arith.constant 0 : i32
    %c0_i32_1 = arith.constant 0 : i32
    return %c0_i32, %c0_i32_0 : i32, i32
  }
  func.func @transform_6(%arg0: i32, %arg1: i32) -> (i32, i32, i32, i32) {
    %c0_i32 = arith.constant 0 : i32
    %c0_i32_0 = arith.constant 0 : i32
    %c0_i32_1 = arith.constant 0 : i32
    return %arg0, %arg1, %c0_i32, %c0_i32_0 : i32, i32, i32, i32
  }
}

</mosaic_0001>

<llo_original>
// kernel: maf_forward.1
$region0: #{maf_forward.1}
  #allocation0 [shape = 'u32[]', space=smem, size = 0x4, offset = 0x4, fixed_abs, tag = 'smem constant byte address 0x4 - core index']
  #allocation1 [shape = 'u32[144,128]{1,0:T(1,128)}', space=vmem, size = 0x12000, scoped, tag = 'internal scratch']
  %s0 = inlined_call_operand.vmem [shape: bf16[2,18,18,256], index: 0, kind: input, shape index: {}, may-alias: {0,1}]
  %s1 = inlined_call_operand.vmem [shape: bf16[2,18,18,256], index: 1, kind: input, shape index: {}, may-alias: {0,1}]
  %s2 = inlined_call_operand.vmem [shape: bf16[9,256], index: 2, kind: input, shape index: {}]
  %s3 = inlined_call_operand.vmem [shape: bf16[256,256], index: 3, kind: input, shape index: {}]
  %s4 = inlined_call_operand.vmem [shape: f32[1,256], index: 4, kind: input, shape index: {}]
  %s5 = inlined_call_operand.vmem [shape: bf16[256,8], index: 5, kind: input, shape index: {}]
  %s6 = inlined_call_operand.vmem [shape: f32[2,16,16,8], index: 6, kind: output, shape index: {}]
  %s7 = sld [smem:[#allocation0]]
  $region57: #{maf_forward.1} parent=0
    _
  %s9 = ssub.s32 1, %s7
  %s10 = scalar_select 0, %s9, %s7
  loop: start=0, step=1, limit=6
  $region2: #{maf_forward.1} parent=0 // loop_pre_header
    _
  $region3: #{maf_forward.1} parent=0 // loop_header
    %s12 = sphi 0, %s16
    %p13 = scmp.ge.s32.totalorder %s12, 6
    %s19 = sphi 0, %s31
    %s20 = sphi 0, %s27
    %s21 = sphi 0, %s19
    %s22 = sphi 0, %s20
    %s23 = sphi 0, %s21
    %s24 = sphi 0, %s22
    %s36 = sphi 0, %s38
    %s39 = sphi 0, %s36
    %s40 = sphi 0, %s39
    %s56 = sphi 0, %s40
    %s68 = sphi 0, %s70
    %s71 = sphi 0, %s68
    %s72 = sphi 0, %s71
    %s88 = sphi 0, %s72
    %s92 = sphi 0, %s92
    %s94 = sphi 0, %s92
    %s95 = sphi 0, %s94
    %s109 = sphi 0, %s95
    %s113 = sphi 0, %s113
    %s115 = sphi 0, %s113
    %s116 = sphi 0, %s115
    %s130 = sphi 0, %s116
    %s134 = sphi 0, %s134
    %s136 = sphi 0, %s134
    %s137 = sphi 0, %s136
    %s151 = sphi 0, %s137
    %s155 = sphi 0, %s155
    %s157 = sphi 0, %s155
    %s158 = sphi 0, %s157
    %s172 = sphi 0, %s158
    %s180 = sphi 0, %s182
    %s183 = sphi 0, %s180
    %s184 = sphi 0, %s183
    %s200 = sphi 0, %s184
  $region4: #{maf_forward.1} parent=0 // loop_header_branch
    %15 = sbr.rel (%p13) target = $region8
  $region5: #{maf_forward.1} parent=0 // loop_body
    %s17 = ssub.s32 %s12, 1
    %s18 = ssub.s32 %s12, 2
    %s25 = sadd.s32 1, %s20
    %p26 = scmp.ge.s32.totalorder %s25, 2
    %s27 = scalar_select %p26, 0, %s25
    %s28 = sadd.s32 1, %s19
    %s29 = scalar_select %p26, %s28, %s19
    %p30 = scmp.ge.s32.totalorder %s29, 2
    %s31 = scalar_select %p30, 0, %s29
    %s32 = ssub.s32 %s19, %s31
    %s33 = ssub.s32 %s20, %s27
    %s34 = sor.u32 %s32, %s33
    %p35 = scmp.eq.s32.totalorder %s34, 0
    %s37 = sadd.s32 %s36, 1
    %s38 = scalar_select %p35, %s36, %s37
    %p41 = pneg %p35
    %p42 = scmp.eq.s32.totalorder %s12, 3
    %p43 = por %p41, %p42
    %p44 = scmp.ne.s32.totalorder %s36, %s39
    %p45 = scmp.eq.s32.totalorder %s12, 0
    %p46 = por %p44, %p45
    %p47 = scmp.ne.s32.totalorder %s36, %s39
    %p48 = scmp.eq.s32.totalorder %s17, 3
    %p49 = por %p47, %p48
    %p50 = scmp.ne.s32.totalorder %s39, %s40
    %p51 = scmp.eq.s32.totalorder %s17, 0
    %p52 = por %p50, %p51
    %p53 = scmp.ne.s32.totalorder %s39, %s40
    %p54 = scmp.eq.s32.totalorder %s18, 3
    %p55 = por %p53, %p54
    %p57 = scmp.ne.s32.totalorder %s40, %s56
    %p58 = scmp.eq.s32.totalorder %s18, 0
    %p59 = por %p57, %p58
    %s60 = sadd.s32 %s20, 1
    %s61 = smul.u32 %s60, 4
    %s62 = sadd.s32 %s27, 1
    %s63 = smul.u32 %s62, 4
    %s64 = ssub.s32 %s19, %s31
    %s65 = ssub.s32 %s61, %s63
    %s66 = sor.u32 %s64, %s65
    %p67 = scmp.eq.s32.totalorder %s66, 0
    %s69 = sadd.s32 %s68, 1
    %s70 = scalar_select %p67, %s68, %s69
    %p73 = pneg %p67
    %p74 = scmp.eq.s32.totalorder %s12, 3
    %p75 = por %p73, %p74
    %p76 = scmp.ne.s32.totalorder %s68, %s71
    %p77 = scmp.eq.s32.totalorder %s12, 0
    %p78 = por %p76, %p77
    %p79 = scmp.ne.s32.totalorder %s68, %s71
    %p80 = scmp.eq.s32.totalorder %s17, 3
    %p81 = por %p79, %p80
    %p82 = scmp.ne.s32.totalorder %s71, %s72
    %p83 = scmp.eq.s32.totalorder %s17, 0
    %p84 = por %p82, %p83
    %p85 = scmp.ne.s32.totalorder %s71, %s72
    %p86 = scmp.eq.s32.totalorder %s18, 3
    %p87 = por %p85, %p86
    %p89 = scmp.ne.s32.totalorder %s72, %s88
    %p90 = scmp.eq.s32.totalorder %s18, 0
    %p91 = por %p89, %p90
    %s93 = sadd.s32 %s92, 1
    %p96 = scmp.eq.s32.totalorder %s12, 3
    %p97 = scmp.ne.s32.totalorder %s92, %s94
    %p98 = scmp.eq.s32.totalorder %s12, 0
    %p99 = por %p97, %p98
    %p100 = scmp.ne.s32.totalorder %s92, %s94
    %p101 = scmp.eq.s32.totalorder %s17, 3
    %p102 = por %p100, %p101
    %p103 = scmp.ne.s32.totalorder %s94, %s95
    %p104 = scmp.eq.s32.totalorder %s17, 0
    %p105 = por %p103, %p104
    %p106 = scmp.ne.s32.totalorder %s94, %s95
    %p107 = scmp.eq.s32.totalorder %s18, 3
    %p108 = por %p106, %p107
    %p110 = scmp.ne.s32.totalorder %s95, %s109
    %p111 = scmp.eq.s32.totalorder %s18, 0
    %p112 = por %p110, %p111
    %s114 = sadd.s32 %s113, 1
    %p117 = scmp.eq.s32.totalorder %s12, 3
    %p118 = scmp.ne.s32.totalorder %s113, %s115
    %p119 = scmp.eq.s32.totalorder %s12, 0
    %p120 = por %p118, %p119
    %p121 = scmp.ne.s32.totalorder %s113, %s115
    %p122 = scmp.eq.s32.totalorder %s17, 3
    %p123 = por %p121, %p122
    %p124 = scmp.ne.s32.totalorder %s115, %s116
    %p125 = scmp.eq.s32.totalorder %s17, 0
    %p126 = por %p124, %p125
    %p127 = scmp.ne.s32.totalorder %s115, %s116
    %p128 = scmp.eq.s32.totalorder %s18, 3
    %p129 = por %p127, %p128
    %p131 = scmp.ne.s32.totalorder %s116, %s130
    %p132 = scmp.eq.s32.totalorder %s18, 0
    %p133 = por %p131, %p132
    %s135 = sadd.s32 %s134, 1
    %p138 = scmp.eq.s32.totalorder %s12, 3
    %p139 = scmp.ne.s32.totalorder %s134, %s136
    %p140 = scmp.eq.s32.totalorder %s12, 0
    %p141 = por %p139, %p140
    %p142 = scmp.ne.s32.totalorder %s134, %s136
    %p143 = scmp.eq.s32.totalorder %s17, 3
    %p144 = por %p142, %p143
    %p145 = scmp.ne.s32.totalorder %s136, %s137
    %p146 = scmp.eq.s32.totalorder %s17, 0
    %p147 = por %p145, %p146
    %p148 = scmp.ne.s32.totalorder %s136, %s137
    %p149 = scmp.eq.s32.totalorder %s18, 3
    %p150 = por %p148, %p149
    %p152 = scmp.ne.s32.totalorder %s137, %s151
    %p153 = scmp.eq.s32.totalorder %s18, 0
    %p154 = por %p152, %p153
    %s156 = sadd.s32 %s155, 1
    %p159 = scmp.eq.s32.totalorder %s12, 3
    %p160 = scmp.ne.s32.totalorder %s155, %s157
    %p161 = scmp.eq.s32.totalorder %s12, 0
    %p162 = por %p160, %p161
    %p163 = scmp.ne.s32.totalorder %s155, %s157
    %p164 = scmp.eq.s32.totalorder %s17, 3
    %p165 = por %p163, %p164
    %p166 = scmp.ne.s32.totalorder %s157, %s158
    %p167 = scmp.eq.s32.totalorder %s17, 0
    %p168 = por %p166, %p167
    %p169 = scmp.ne.s32.totalorder %s157, %s158
    %p170 = scmp.eq.s32.totalorder %s18, 3
    %p171 = por %p169, %p170
    %p173 = scmp.ne.s32.totalorder %s158, %s172
    %p174 = scmp.eq.s32.totalorder %s18, 0
    %p175 = por %p173, %p174
    %s176 = ssub.s32 %s19, %s31
    %s177 = ssub.s32 %s20, %s27
    %s178 = sor.u32 %s176, %s177
    %p179 = scmp.eq.s32.totalorder %s178, 0
    %s181 = sadd.s32 %s180, 1
    %s182 = scalar_select %p179, %s180, %s181
    %p185 = pneg %p179
    %p186 = scmp.eq.s32.totalorder %s12, 3
    %p187 = por %p185, %p186
    %p188 = scmp.ne.s32.totalorder %s180, %s183
    %p189 = scmp.eq.s32.totalorder %s12, 0
    %p190 = por %p188, %p189
    %p191 = scmp.ne.s32.totalorder %s180, %s183
    %p192 = scmp.eq.s32.totalorder %s17, 3
    %p193 = por %p191, %p192
    %p194 = scmp.ne.s32.totalorder %s183, %s184
    %p195 = scmp.eq.s32.totalorder %s17, 0
    %p196 = por %p194, %p195
    %p197 = scmp.ne.s32.totalorder %s183, %s184
    %p198 = scmp.eq.s32.totalorder %s18, 3
    %p199 = por %p197, %p198
    %p201 = scmp.ne.s32.totalorder %s184, %s200
    %p202 = scmp.eq.s32.totalorder %s18, 0
    %p203 = por %p201, %p202
    %p204 = scmp.le.s32.totalorder 1, %s12
    %p205 = scmp.lt.s32.totalorder %s12, 5
    %p206 = pnand %p204, %p205
    %p207 = pneg %p206
    // Predicated region
    $region9: #{maf_forward.1} parent=5 // pred_check
      _
    $region10: #{maf_forward.1} parent=5 // pred_check_branch
      %209 = sbr.rel (%p206) target = $region12
    $region11: #{maf_forward.1} parent=5 // pred_region
      %s210 = ssub.s32 %s12, 1
      // Predicated region
      $region13: #{maf_forward.1} parent=11 // pred_check
        %p211 = pneg %p105
      $region14: #{maf_forward.1} parent=11 // pred_check_branch
        %213 = sbr.rel (%p211) target = $region16
      $region15: #{maf_forward.1} parent=11 // pred_region
        _
      $region16: #{maf_forward.1} parent=11 // pred_fallthru
        _
      // Predicated region
      $region17: #{maf_forward.1} parent=11 // pred_check
        %p214 = pneg %p126
      $region18: #{maf_forward.1} parent=11 // pred_check_branch
        %216 = sbr.rel (%p214) target = $region20
      $region19: #{maf_forward.1} parent=11 // pred_region
        _
      $region20: #{maf_forward.1} parent=11 // pred_fallthru
        _
      // Predicated region
      $region21: #{maf_forward.1} parent=11 // pred_check
        %p217 = pneg %p147
      $region22: #{maf_forward.1} parent=11 // pred_check_branch
        %219 = sbr.rel (%p217) target = $region24
      $region23: #{maf_forward.1} parent=11 // pred_region
        _
      $region24: #{maf_forward.1} parent=11 // pred_fallthru
        _
      // Predicated region
      $region25: #{maf_forward.1} parent=11 // pred_check
        %p220 = pneg %p168
      $region26: #{maf_forward.1} parent=11 // pred_check_branch
        %222 = sbr.rel (%p220) target = $region28
      $region27: #{maf_forward.1} parent=11 // pred_region
        _
      $region28: #{maf_forward.1} parent=11 // pred_fallthru
        _
    $region12: #{maf_forward.1} parent=5 // pred_fallthru
      _
    %p223 = scmp.lt.s32.totalorder %s12, 4
    // Predicated region
    $region29: #{maf_forward.1} parent=5 // pred_check
      %p224 = pneg %p223
    $region30: #{maf_forward.1} parent=5 // pred_check_branch
      %226 = sbr.rel (%p224) target = $region32
    $region31: #{maf_forward.1} parent=5 // pred_region
      // Predicated region
      $region33: #{maf_forward.1} parent=31 // pred_check
        %p227 = pneg %p46
      $region34: #{maf_forward.1} parent=31 // pred_check_branch
        %229 = sbr.rel (%p227) target = $region36
      $region35: #{maf_forward.1} parent=31 // pred_region
        %s230 = smul.u32 8, %s20
        %s231 = ssub.s32 18, %s230
        %p232 = scmp.lt.s32.totalorder %s231, 8
        %s233 = scalar_select %p232, %s231, 8
        %s234 = smul.u32 64, %s233
        %s235 = smul.u32 %s234, 3
        %s236 = smul.u32 %s235, 2
        %p237 = scmp.lt.s32.totalorder %s19, 1
        %s238 = scalar_select %p237, %s19, 1
        %p239 = scmp.lt.s32.totalorder %s230, 17
        %s240 = scalar_select %p239, %s230, 17
        %s241 = smul.addr %s240, 6
        %s242 = smul.addr %s238, 108
        %s243 = sadd.s32 %s241, %s242
        %s244 = smul.addr %s243, 4
        %s245 = scalar_lea.vmem %s0, %s244
        %s246 = smul.u32 8, %s20
        %s247 = ssub.s32 18, %s246
        %p248 = scmp.lt.s32.totalorder %s247, 8
        %s249 = scalar_select %p248, %s247, 8
        %s250 = smul.u32 64, %s249
        %s251 = smul.u32 %s250, 3
        %s252 = smul.u32 %s251, 2
      $region36: #{maf_forward.1} parent=31 // pred_fallthru
        _
      // Predicated region
      $region37: #{maf_forward.1} parent=31 // pred_check
        %p253 = pneg %p78
      $region38: #{maf_forward.1} parent=31 // pred_check_branch
        %255 = sbr.rel (%p253) target = $region40
      $region39: #{maf_forward.1} parent=31 // pred_region
        %s256 = sadd.s32 %s20, 1
        %s257 = smul.u32 %s256, 4
        %s258 = smul.u32 2, %s257
        %p259 = scmp.lt.s32.totalorder %s19, 1
        %s260 = scalar_select %p259, %s19, 1
        %p261 = scmp.lt.s32.totalorder %s258, 17
        %s262 = scalar_select %p261, %s258, 17
        %s263 = smul.addr %s262, 6
        %s264 = smul.addr %s260, 108
        %s265 = sadd.s32 %s263, %s264
        %s266 = smul.addr %s265, 4
        %s267 = scalar_lea.vmem %s1, %s266
        %s268 = sadd.s32 %s20, 1
        %s269 = smul.u32 %s268, 4
        %s270 = smul.u32 2, %s269
      $region40: #{maf_forward.1} parent=31 // pred_fallthru
        _
    $region32: #{maf_forward.1} parent=5 // pred_fallthru
      _
    %p271 = scmp.le.s32.totalorder 1, %s12
    %p272 = scmp.lt.s32.totalorder %s12, 5
    %p273 = pnand %p271, %p272
    %p274 = pneg %p273
    // Predicated region
    $region41: #{maf_forward.1} parent=5 // pred_check
      _
    $region42: #{maf_forward.1} parent=5 // pred_check_branch
      %276 = sbr.rel (%p273) target = $region44
    $region43: #{maf_forward.1} parent=5 // pred_region
      %s277 = ssub.s32 %s12, 1
      %s278 = smul.u32 8, %s22
      %s279 = ssub.s32 18, %s278
      %p280 = scmp.lt.s32.totalorder %s279, 8
      %s281 = scalar_select %p280, %s279, 8
      %s282 = smul.u32 64, %s281
      %s283 = smul.u32 %s282, 3
      %s284 = smul.u32 %s283, 2
      %p285 = scmp.lt.s32.totalorder %s21, 1
      %s286 = scalar_select %p285, %s21, 1
      %p287 = scmp.lt.s32.totalorder %s278, 17
      %s288 = scalar_select %p287, %s278, 17
      %s289 = smul.addr %s288, 6
      %s290 = smul.addr %s286, 108
      %s291 = sadd.s32 %s289, %s290
      %s292 = smul.addr %s291, 4
      %s293 = scalar_lea.vmem %s0, %s292
      %p294 = pneg %p52
      %p295 = pneg %p49
      %s296 = sadd.s32 %s22, 1
      %s297 = smul.u32 %s296, 4
      %s298 = smul.u32 2, %s297
      %p299 = scmp.lt.s32.totalorder %s21, 1
      %s300 = scalar_select %p299, %s21, 1
      %p301 = scmp.lt.s32.totalorder %s298, 17
      %s302 = scalar_select %p301, %s298, 17
      %s303 = smul.addr %s302, 6
      %s304 = smul.addr %s300, 108
      %s305 = sadd.s32 %s303, %s304
      %s306 = smul.addr %s305, 4
      %s307 = scalar_lea.vmem %s1, %s306
      %p308 = pneg %p84
      %p309 = pneg %p81
      %p310 = pneg %p105
      %p311 = pneg %p102
      %p312 = pneg %p126
      %p313 = pneg %p123
      %p314 = pneg %p147
      %p315 = pneg %p144
      %p316 = pneg %p168
      %p317 = pneg %p165
      %p318 = pneg %p196
      %p319 = pneg %p193
      %s320 = smul.u32 8, %s22
      %p321 = scmp.lt.s32.totalorder %s21, 1
      %s322 = scalar_select %p321, %s21, 1
      %p323 = scmp.lt.s32.totalorder %s320, 15
      %s324 = scalar_select %p323, %s320, 15
      %s325 = smul.addr %s324, 2
      %s326 = smul.addr %s322, 32
      %s327 = sadd.s32 %s325, %s326
      %s328 = smul.addr %s327, 8
      %s329 = scalar_lea.vmem %s6, %s328
      %s330 = smul.u32 8, %s22
      %s331 = ssub.s32 18, %s330
      %p332 = scmp.lt.s32.totalorder %s331, 8
      %s333 = scalar_select %p332, %s331, 8
      %s334 = smul.u32 64, %s333
      %s335 = smul.u32 %s334, 3
      %s336 = smul.u32 %s335, 2
      %p337 = scmp.lt.s32.totalorder %s21, 1
      %s338 = scalar_select %p337, %s21, 1
      %p339 = scmp.lt.s32.totalorder %s330, 17
      %s340 = scalar_select %p339, %s330, 17
      %s341 = smul.addr %s340, 6
      %s342 = smul.addr %s338, 108
      %s343 = sadd.s32 %s341, %s342
      %s344 = smul.addr %s343, 4
      %s345 = scalar_lea.vmem %s0, %s344
      %s346 = smul.u32 8, %s22
      %s347 = ssub.s32 18, %s346
      %p348 = scmp.lt.s32.totalorder %s347, 8
      %s349 = scalar_select %p348, %s347, 8
      %s350 = smul.u32 64, %s349
      %s351 = smul.u32 %s350, 3
      %s352 = smul.u32 %s351, 2
      %s353 = sadd.s32 %s22, 1
      %s354 = smul.u32 %s353, 4
      %s355 = smul.u32 2, %s354
      %p356 = scmp.lt.s32.totalorder %s21, 1
      %s357 = scalar_select %p356, %s21, 1
      %p358 = scmp.lt.s32.totalorder %s355, 17
      %s359 = scalar_select %p358, %s355, 17
      %s360 = smul.addr %s359, 6
      %s361 = smul.addr %s357, 108
      %s362 = sadd.s32 %s360, %s361
      %s363 = smul.addr %s362, 4
      %s364 = scalar_lea.vmem %s1, %s363
      %s365 = sadd.s32 %s22, 1
      %s366 = smul.u32 %s365, 4
      %s367 = smul.u32 2, %s366
      %s368 = smul.u32 8, %s22
      %p369 = scmp.lt.s32.totalorder %s21, 1
      %s370 = scalar_select %p369, %s21, 1
      %p371 = scmp.lt.s32.totalorder %s368, 15
      %s372 = scalar_select %p371, %s368, 15
      %s373 = smul.addr %s372, 2
      %s374 = smul.addr %s370, 32
      %s375 = sadd.s32 %s373, %s374
      %s376 = smul.addr %s375, 8
      %s377 = scalar_lea.vmem %s6, %s376
      %s378 = smul.u32 8, %s22
      %v380 = vld [vmem:[%s2] sm:$0xff]
      %v381 = vld [vmem:[%s2 + $0x8] sm:$0x11]
      %v382 = vld [vmem:[%s345] sm:$0xff]
      %v383 = vld [vmem:[%s345 + $0x8] sm:$0xff]
      %v384 = vld [vmem:[%s345 + $0x18] sm:$0xff]
      %v385 = vld [vmem:[%s345 + $0x20] sm:$0xff]
      %v386 = vld [vmem:[%s345 + $0x30] sm:$0xff]
      %v387 = vld [vmem:[%s345 + $0x38] sm:$0xff]
      %v388 = vld [vmem:[%s345 + $0x48] sm:$0xff]
      %v389 = vld [vmem:[%s345 + $0x50] sm:$0xff]
      %v390 = vld [vmem:[%s345 + $0x60] sm:$0xff]
      %v391 = vld [vmem:[%s345 + $0x68] sm:$0xff]
      %v392 = vld [vmem:[%s345 + $0x78] sm:$0xff]
      %v393 = vld [vmem:[%s345 + $0x80] sm:$0xff]
      %v394 = vld [vmem:[%s345 + $0x90] sm:$0xff]
      %v395 = vld [vmem:[%s345 + $0x98] sm:$0xff]
      %v396 = vld [vmem:[%s345 + $0xa8] sm:$0xff]
      %v397 = vld [vmem:[%s345 + $0xb0] sm:$0xff]
      %v398 = vld [vmem:[%s345 + $0x10] sm:$0x11]
      %v399 = vld [vmem:[%s345 + $0x28] sm:$0x11]
      %v400 = vld [vmem:[%s345 + $0x40] sm:$0x11]
      %v401 = vld [vmem:[%s345 + $0x58] sm:$0x11]
      %v402 = vld [vmem:[%s345 + $0x70] sm:$0x11]
      %v403 = vld [vmem:[%s345 + $0x88] sm:$0x11]
      %v404 = vld [vmem:[%s345 + $0xa0] sm:$0x11]
      %v405 = vld [vmem:[%s345 + $0xb8] sm:$0x11]
      %v406 = vld [vmem:[%s345] sm:$0xee]
      %v407 = vld [vmem:[%s345 + $0x18] sm:$0xee]
      %v408 = vld [vmem:[%s345 + $0x30] sm:$0xee]
      %v409 = vld [vmem:[%s345 + $0x48] sm:$0xee]
      %v410 = vld [vmem:[%s345 + $0x60] sm:$0xee]
      %v411 = vld [vmem:[%s345 + $0x78] sm:$0xee]
      %v412 = vld [vmem:[%s345 + $0x90] sm:$0xee]
      %v413 = vld [vmem:[%s345 + $0xa8] sm:$0xee]
      %v414 = vld [vmem:[%s364] sm:$0xff]
      %v415 = vld [vmem:[%s364 + $0x8] sm:$0xff]
      %v416 = vld [vmem:[%s364 + $0x10] sm:$0x11]
      %v417 = vld [vmem:[%s364 + $0x18] sm:$0xff]
      %v418 = vld [vmem:[%s364 + $0x20] sm:$0xff]
      %v419 = vld [vmem:[%s364 + $0x28] sm:$0x11]
      %v421 = vunpack.c.l.b16 %v380
      %v422 = vunpack.c.h.b16 %v380
      %v423 = vpack.c.b16 %v421, %v421
      %v424 = vpack.c.b16 %v422, %v422
      %v426 = vpack.i.b16 %v423, %v423
      %v428 = vlaneseq
      %v429 = vshrl.u32 %v428, 7
      %v430 = vsub.s32 0, %v429
      %v431 = vrot.slane %v426, %v430
      %v433 = vpack.i.b16 %v424, %v424
      %v435 = vlaneseq
      %v436 = vshrl.u32 %v435, 7
      %v437 = vsub.s32 0, %v436
      %v438 = vrot.slane %v433, %v437
      %v441 = vunpack.c.l.b16 %v431
      %v442 = vunpack.c.l.b16 %v438
      %v443 = vpack.c.b16 %v442, %v441
      %v445 = vmul.bf16 %v382, %v443
      %v446 = vmul.bf16 %v383, %v443
      %v447 = vmul.bf16 %v384, %v443
      %v448 = vmul.bf16 %v385, %v443
      %v449 = vmul.bf16 %v386, %v443
      %v450 = vmul.bf16 %v387, %v443
      %v451 = vmul.bf16 %v388, %v443
      %v452 = vmul.bf16 %v389, %v443
      %v453 = vmul.bf16 %v390, %v443
      %v454 = vmul.bf16 %v391, %v443
      %v455 = vmul.bf16 %v392, %v443
      %v456 = vmul.bf16 %v393, %v443
      %v457 = vshrl.u32 %v423, 16
      %v458 = vpack.i.b16 %v457, %v457
      %v460 = vlaneseq
      %v461 = vshrl.u32 %v460, 7
      %v462 = vsub.s32 0, %v461
      %v463 = vrot.slane %v458, %v462
      %v464 = vshrl.u32 %v424, 16
      %v465 = vpack.i.b16 %v464, %v464
      %v467 = vlaneseq
      %v468 = vshrl.u32 %v467, 7
      %v469 = vsub.s32 0, %v468
      %v470 = vrot.slane %v465, %v469
      %v473 = vunpack.c.l.b16 %v463
      %v474 = vunpack.c.l.b16 %v470
      %v475 = vpack.c.b16 %v474, %v473
      %v477 = vmul.bf16 %v382, %v475
      %v478 = vmul.bf16 %v383, %v475
      %v479 = vmul.bf16 %v398, %v475
      %v480 = vmul.bf16 %v384, %v475
      %v481 = vmul.bf16 %v385, %v475
      %v482 = vmul.bf16 %v399, %v475
      %v483 = vmul.bf16 %v386, %v475
      %v484 = vmul.bf16 %v387, %v475
      %v485 = vmul.bf16 %v400, %v475
      %v486 = vmul.bf16 %v388, %v475
      %v487 = vmul.bf16 %v389, %v475
      %v488 = vmul.bf16 %v401, %v475
      %v489 = vmul.bf16 %v390, %v475
      %v490 = vmul.bf16 %v391, %v475
      %v491 = vmul.bf16 %v402, %v475
      %v492 = vmul.bf16 %v392, %v475
      %v493 = vmul.bf16 %v393, %v475
      %v494 = vmul.bf16 %v403, %v475
      %vm495 = vsmask.f32 3328
      %vm496 = vsmask.f32 7440
      %vm497 = vmor %vm495, %vm496
      %v499 = vshrl.u32 %v477, 16
      %v501 = vrot.slane %v499, 4
      %v502 = vshll.u32 %v477, 16
      %v504 = vrot.slane %v502, 5
      %v505 = vor.u32 %v501, %v504
      %v506 = vrot.slane %v505, 4
      %v508 = vshll.u32 %v478, 16
      %v510 = vrot.slane %v508, 5
      %v511 = vsel %vm497, %v506, %v510
      %v512 = vshrl.u32 %v478, 16
      %v514 = vrot.slane %v512, 4
      %v515 = vor.u32 %v514, %v510
      %v516 = vrot.slane %v515, 4
      %v518 = vshll.u32 %v479, 16
      %v520 = vrot.slane %v518, 5
      %v521 = vsel %vm497, %v516, %v520
      %v523 = vshrl.u32 %v480, 16
      %v525 = vrot.slane %v523, 4
      %v526 = vshll.u32 %v480, 16
      %v528 = vrot.slane %v526, 5
      %v529 = vor.u32 %v525, %v528
      %v530 = vrot.slane %v529, 4
      %v532 = vshll.u32 %v481, 16
      %v534 = vrot.slane %v532, 5
      %v535 = vsel %vm497, %v530, %v534
      %v536 = vshrl.u32 %v481, 16
      %v538 = vrot.slane %v536, 4
      %v539 = vor.u32 %v538, %v534
      %v540 = vrot.slane %v539, 4
      %v542 = vshll.u32 %v482, 16
      %v544 = vrot.slane %v542, 5
      %v545 = vsel %vm497, %v540, %v544
      %v547 = vshrl.u32 %v483, 16
      %v549 = vrot.slane %v547, 4
      %v550 = vshll.u32 %v483, 16
      %v552 = vrot.slane %v550, 5
      %v553 = vor.u32 %v549, %v552
      %v554 = vrot.slane %v553, 4
      %v556 = vshll.u32 %v484, 16
      %v558 = vrot.slane %v556, 5
      %v559 = vsel %vm497, %v554, %v558
      %v560 = vshrl.u32 %v484, 16
      %v562 = vrot.slane %v560, 4
      %v563 = vor.u32 %v562, %v558
      %v564 = vrot.slane %v563, 4
      %v566 = vshll.u32 %v485, 16
      %v568 = vrot.slane %v566, 5
      %v569 = vsel %vm497, %v564, %v568
      %v571 = vshrl.u32 %v486, 16
      %v573 = vrot.slane %v571, 4
      %v574 = vshll.u32 %v486, 16
      %v576 = vrot.slane %v574, 5
      %v577 = vor.u32 %v573, %v576
      %v578 = vrot.slane %v577, 4
      %v580 = vshll.u32 %v487, 16
      %v582 = vrot.slane %v580, 5
      %v583 = vsel %vm497, %v578, %v582
      %v584 = vshrl.u32 %v487, 16
      %v586 = vrot.slane %v584, 4
      %v587 = vor.u32 %v586, %v582
      %v588 = vrot.slane %v587, 4
      %v590 = vshll.u32 %v488, 16
      %v592 = vrot.slane %v590, 5
      %v593 = vsel %vm497, %v588, %v592
      %v595 = vshrl.u32 %v489, 16
      %v597 = vrot.slane %v595, 4
      %v598 = vshll.u32 %v489, 16
      %v600 = vrot.slane %v598, 5
      %v601 = vor.u32 %v597, %v600
      %v602 = vrot.slane %v601, 4
      %v604 = vshll.u32 %v490, 16
      %v606 = vrot.slane %v604, 5
      %v607 = vsel %vm497, %v602, %v606
      %v608 = vshrl.u32 %v490, 16
      %v610 = vrot.slane %v608, 4
      %v611 = vor.u32 %v610, %v606
      %v612 = vrot.slane %v611, 4
      %v614 = vshll.u32 %v491, 16
      %v616 = vrot.slane %v614, 5
      %v617 = vsel %vm497, %v612, %v616
      %v619 = vshrl.u32 %v492, 16
      %v621 = vrot.slane %v619, 4
      %v622 = vshll.u32 %v492, 16
      %v624 = vrot.slane %v622, 5
      %v625 = vor.u32 %v621, %v624
      %v626 = vrot.slane %v625, 4
      %v628 = vshll.u32 %v493, 16
      %v630 = vrot.slane %v628, 5
      %v631 = vsel %vm497, %v626, %v630
      %v632 = vshrl.u32 %v493, 16
      %v634 = vrot.slane %v632, 4
      %v635 = vor.u32 %v634, %v630
      %v636 = vrot.slane %v635, 4
      %v638 = vshll.u32 %v494, 16
      %v640 = vrot.slane %v638, 5
      %v641 = vsel %vm497, %v636, %v640
      %v654 = vadd.bf16 %v445, %v511
      %v655 = vadd.bf16 %v446, %v521
      %v656 = vadd.bf16 %v447, %v535
      %v657 = vadd.bf16 %v448, %v545
      %v658 = vadd.bf16 %v449, %v559
      %v659 = vadd.bf16 %v450, %v569
      %v660 = vadd.bf16 %v451, %v583
      %v661 = vadd.bf16 %v452, %v593
      %v662 = vadd.bf16 %v453, %v607
      %v663 = vadd.bf16 %v454, %v617
      %v664 = vadd.bf16 %v455, %v631
      %v665 = vadd.bf16 %v456, %v641
      %v666 = vlaneseq
      %v667 = vshrl.u32 %v666, 7
      %v668 = vsub.s32 1, %v667
      %v669 = vrot.slane %v426, %v668
      %v670 = vlaneseq
      %v671 = vshrl.u32 %v670, 7
      %v672 = vsub.s32 1, %v671
      %v673 = vrot.slane %v433, %v672
      %v676 = vunpack.c.l.b16 %v669
      %v677 = vunpack.c.l.b16 %v673
      %v678 = vpack.c.b16 %v677, %v676
      %v680 = vmul.bf16 %v406, %v678
      %v681 = vmul.bf16 %v383, %v678
      %v682 = vmul.bf16 %v398, %v678
      %v683 = vmul.bf16 %v407, %v678
      %v684 = vmul.bf16 %v385, %v678
      %v685 = vmul.bf16 %v399, %v678
      %v686 = vmul.bf16 %v408, %v678
      %v687 = vmul.bf16 %v387, %v678
      %v688 = vmul.bf16 %v400, %v678
      %v689 = vmul.bf16 %v409, %v678
      %v690 = vmul.bf16 %v389, %v678
      %v691 = vmul.bf16 %v401, %v678
      %v692 = vmul.bf16 %v410, %v678
      %v693 = vmul.bf16 %v391, %v678
      %v694 = vmul.bf16 %v402, %v678
      %v695 = vmul.bf16 %v411, %v678
      %v696 = vmul.bf16 %v393, %v678
      %v697 = vmul.bf16 %v403, %v678
      %vm716 = vcmask 1042432
      %vm717 = vcmask 1046532
      %vm718 = vmor %vm716, %vm717
      %v719 = vrot.slane %v680, 5
      %v720 = vrot.slane %v719, 4
      %v721 = vrot.slane %v681, 5
      %v722 = vsel %vm718, %v720, %v721
      %v723 = vrot.slane %v721, 4
      %v724 = vrot.slane %v682, 5
      %v725 = vsel %vm718, %v723, %v724
      %v726 = vrot.slane %v683, 5
      %v727 = vrot.slane %v726, 4
      %v728 = vrot.slane %v684, 5
      %v729 = vsel %vm718, %v727, %v728
      %v730 = vrot.slane %v728, 4
      %v731 = vrot.slane %v685, 5
      %v732 = vsel %vm718, %v730, %v731
      %v733 = vrot.slane %v686, 5
      %v734 = vrot.slane %v733, 4
      %v735 = vrot.slane %v687, 5
      %v736 = vsel %vm718, %v734, %v735
      %v737 = vrot.slane %v735, 4
      %v738 = vrot.slane %v688, 5
      %v739 = vsel %vm718, %v737, %v738
      %v740 = vrot.slane %v689, 5
      %v741 = vrot.slane %v740, 4
      %v742 = vrot.slane %v690, 5
      %v743 = vsel %vm718, %v741, %v742
      %v744 = vrot.slane %v742, 4
      %v745 = vrot.slane %v691, 5
      %v746 = vsel %vm718, %v744, %v745
      %v747 = vrot.slane %v692, 5
      %v748 = vrot.slane %v747, 4
      %v749 = vrot.slane %v693, 5
      %v750 = vsel %vm718, %v748, %v749
      %v751 = vrot.slane %v749, 4
      %v752 = vrot.slane %v694, 5
      %v753 = vsel %vm718, %v751, %v752
      %v754 = vrot.slane %v695, 5
      %v755 = vrot.slane %v754, 4
      %v756 = vrot.slane %v696, 5
      %v757 = vsel %vm718, %v755, %v756
      %v758 = vrot.slane %v756, 4
      %v759 = vrot.slane %v697, 5
      %v760 = vsel %vm718, %v758, %v759
      %v773 = vadd.bf16 %v654, %v722
      %v774 = vadd.bf16 %v655, %v725
      %v775 = vadd.bf16 %v656, %v729
      %v776 = vadd.bf16 %v657, %v732
      %v777 = vadd.bf16 %v658, %v736
      %v778 = vadd.bf16 %v659, %v739
      %v779 = vadd.bf16 %v660, %v743
      %v780 = vadd.bf16 %v661, %v746
      %v781 = vadd.bf16 %v662, %v750
      %v782 = vadd.bf16 %v663, %v753
      %v783 = vadd.bf16 %v664, %v757
      %v784 = vadd.bf16 %v665, %v760
      %v785 = vlaneseq
      %v786 = vshrl.u32 %v785, 7
      %v787 = vsub.s32 1, %v786
      %v788 = vrot.slane %v458, %v787
      %v789 = vlaneseq
      %v790 = vshrl.u32 %v789, 7
      %v791 = vsub.s32 1, %v790
      %v792 = vrot.slane %v465, %v791
      %v795 = vunpack.c.l.b16 %v788
      %v796 = vunpack.c.l.b16 %v792
      %v797 = vpack.c.b16 %v796, %v795
      %v799 = vmul.bf16 %v384, %v797
      %v800 = vmul.bf16 %v385, %v797
      %v801 = vmul.bf16 %v386, %v797
      %v802 = vmul.bf16 %v387, %v797
      %v803 = vmul.bf16 %v388, %v797
      %v804 = vmul.bf16 %v389, %v797
      %v805 = vmul.bf16 %v390, %v797
      %v806 = vmul.bf16 %v391, %v797
      %v807 = vmul.bf16 %v392, %v797
      %v808 = vmul.bf16 %v393, %v797
      %v809 = vmul.bf16 %v394, %v797
      %v810 = vmul.bf16 %v395, %v797
      %v811 = vadd.bf16 %v773, %v799
      %v812 = vadd.bf16 %v774, %v800
      %v813 = vadd.bf16 %v775, %v801
      %v814 = vadd.bf16 %v776, %v802
      %v815 = vadd.bf16 %v777, %v803
      %v816 = vadd.bf16 %v778, %v804
      %v817 = vadd.bf16 %v779, %v805
      %v818 = vadd.bf16 %v780, %v806
      %v819 = vadd.bf16 %v781, %v807
      %v820 = vadd.bf16 %v782, %v808
      %v821 = vadd.bf16 %v783, %v809
      %v822 = vadd.bf16 %v784, %v810
      %v823 = vlaneseq
      %v824 = vshrl.u32 %v823, 7
      %v825 = vsub.s32 2, %v824
      %v826 = vrot.slane %v426, %v825
      %v827 = vlaneseq
      %v828 = vshrl.u32 %v827, 7
      %v829 = vsub.s32 2, %v828
      %v830 = vrot.slane %v433, %v829
      %v833 = vunpack.c.l.b16 %v826
      %v834 = vunpack.c.l.b16 %v830
      %v835 = vpack.c.b16 %v834, %v833
      %v837 = vmul.bf16 %v384, %v835
      %v838 = vmul.bf16 %v385, %v835
      %v839 = vmul.bf16 %v399, %v835
      %v840 = vmul.bf16 %v386, %v835
      %v841 = vmul.bf16 %v387, %v835
      %v842 = vmul.bf16 %v400, %v835
      %v843 = vmul.bf16 %v388, %v835
      %v844 = vmul.bf16 %v389, %v835
      %v845 = vmul.bf16 %v401, %v835
      %v846 = vmul.bf16 %v390, %v835
      %v847 = vmul.bf16 %v391, %v835
      %v848 = vmul.bf16 %v402, %v835
      %v849 = vmul.bf16 %v392, %v835
      %v850 = vmul.bf16 %v393, %v835
      %v851 = vmul.bf16 %v403, %v835
      %v852 = vmul.bf16 %v394, %v835
      %v853 = vmul.bf16 %v395, %v835
      %v854 = vmul.bf16 %v404, %v835
      %v856 = vshrl.u32 %v837, 16
      %v858 = vrot.slane %v856, 4
      %v859 = vshll.u32 %v837, 16
      %v861 = vrot.slane %v859, 5
      %v862 = vor.u32 %v858, %v861
      %v863 = vrot.slane %v862, 4
      %v865 = vshll.u32 %v838, 16
      %v867 = vrot.slane %v865, 5
      %v868 = vsel %vm497, %v863, %v867
      %v869 = vshrl.u32 %v838, 16
      %v871 = vrot.slane %v869, 4
      %v872 = vor.u32 %v871, %v867
      %v873 = vrot.slane %v872, 4
      %v875 = vshll.u32 %v839, 16
      %v877 = vrot.slane %v875, 5
      %v878 = vsel %vm497, %v873, %v877
      %v880 = vshrl.u32 %v840, 16
      %v882 = vrot.slane %v880, 4
      %v883 = vshll.u32 %v840, 16
      %v885 = vrot.slane %v883, 5
      %v886 = vor.u32 %v882, %v885
      %v887 = vrot.slane %v886, 4
      %v889 = vshll.u32 %v841, 16
      %v891 = vrot.slane %v889, 5
      %v892 = vsel %vm497, %v887, %v891
      %v893 = vshrl.u32 %v841, 16
      %v895 = vrot.slane %v893, 4
      %v896 = vor.u32 %v895, %v891
      %v897 = vrot.slane %v896, 4
      %v899 = vshll.u32 %v842, 16
      %v901 = vrot.slane %v899, 5
      %v902 = vsel %vm497, %v897, %v901
      %v904 = vshrl.u32 %v843, 16
      %v906 = vrot.slane %v904, 4
      %v907 = vshll.u32 %v843, 16
      %v909 = vrot.slane %v907, 5
      %v910 = vor.u32 %v906, %v909
      %v911 = vrot.slane %v910, 4
      %v913 = vshll.u32 %v844, 16
      %v915 = vrot.slane %v913, 5
      %v916 = vsel %vm497, %v911, %v915
      %v917 = vshrl.u32 %v844, 16
      %v919 = vrot.slane %v917, 4
      %v920 = vor.u32 %v919, %v915
      %v921 = vrot.slane %v920, 4
      %v923 = vshll.u32 %v845, 16
      %v925 = vrot.slane %v923, 5
      %v926 = vsel %vm497, %v921, %v925
      %v928 = vshrl.u32 %v846, 16
      %v930 = vrot.slane %v928, 4
      %v931 = vshll.u32 %v846, 16
      %v933 = vrot.slane %v931, 5
      %v934 = vor.u32 %v930, %v933
      %v935 = vrot.slane %v934, 4
      %v937 = vshll.u32 %v847, 16
      %v939 = vrot.slane %v937, 5
      %v940 = vsel %vm497, %v935, %v939
      %v941 = vshrl.u32 %v847, 16
      %v943 = vrot.slane %v941, 4
      %v944 = vor.u32 %v943, %v939
      %v945 = vrot.slane %v944, 4
      %v947 = vshll.u32 %v848, 16
      %v949 = vrot.slane %v947, 5
      %v950 = vsel %vm497, %v945, %v949
      %v952 = vshrl.u32 %v849, 16
      %v954 = vrot.slane %v952, 4
      %v955 = vshll.u32 %v849, 16
      %v957 = vrot.slane %v955, 5
      %v958 = vor.u32 %v954, %v957
      %v959 = vrot.slane %v958, 4
      %v961 = vshll.u32 %v850, 16
      %v963 = vrot.slane %v961, 5
      %v964 = vsel %vm497, %v959, %v963
      %v965 = vshrl.u32 %v850, 16
      %v967 = vrot.slane %v965, 4
      %v968 = vor.u32 %v967, %v963
      %v969 = vrot.slane %v968, 4
      %v971 = vshll.u32 %v851, 16
      %v973 = vrot.slane %v971, 5
      %v974 = vsel %vm497, %v969, %v973
      %v976 = vshrl.u32 %v852, 16
      %v978 = vrot.slane %v976, 4
      %v979 = vshll.u32 %v852, 16
      %v981 = vrot.slane %v979, 5
      %v982 = vor.u32 %v978, %v981
      %v983 = vrot.slane %v982, 4
      %v985 = vshll.u32 %v853, 16
      %v987 = vrot.slane %v985, 5
      %v988 = vsel %vm497, %v983, %v987
      %v989 = vshrl.u32 %v853, 16
      %v991 = vrot.slane %v989, 4
      %v992 = vor.u32 %v991, %v987
      %v993 = vrot.slane %v992, 4
      %v995 = vshll.u32 %v854, 16
      %v997 = vrot.slane %v995, 5
      %v998 = vsel %vm497, %v993, %v997
      %v1011 = vadd.bf16 %v811, %v868
      %v1012 = vadd.bf16 %v812, %v878
      %v1013 = vadd.bf16 %v813, %v892
      %v1014 = vadd.bf16 %v814, %v902
      %v1015 = vadd.bf16 %v815, %v916
      %v1016 = vadd.bf16 %v816, %v926
      %v1017 = vadd.bf16 %v817, %v940
      %v1018 = vadd.bf16 %v818, %v950
      %v1019 = vadd.bf16 %v819, %v964
      %v1020 = vadd.bf16 %v820, %v974
      %v1021 = vadd.bf16 %v821, %v988
      %v1022 = vadd.bf16 %v822, %v998
      %v1023 = vlaneseq
      %v1024 = vshrl.u32 %v1023, 7
      %v1025 = vsub.s32 2, %v1024
      %v1026 = vrot.slane %v458, %v1025
      %v1027 = vlaneseq
      %v1028 = vshrl.u32 %v1027, 7
      %v1029 = vsub.s32 2, %v1028
      %v1030 = vrot.slane %v465, %v1029
      %v1033 = vunpack.c.l.b16 %v1026
      %v1034 = vunpack.c.l.b16 %v1030
      %v1035 = vpack.c.b16 %v1034, %v1033
      %v1037 = vmul.bf16 %v407, %v1035
      %v1038 = vmul.bf16 %v385, %v1035
      %v1039 = vmul.bf16 %v399, %v1035
      %v1040 = vmul.bf16 %v408, %v1035
      %v1041 = vmul.bf16 %v387, %v1035
      %v1042 = vmul.bf16 %v400, %v1035
      %v1043 = vmul.bf16 %v409, %v1035
      %v1044 = vmul.bf16 %v389, %v1035
      %v1045 = vmul.bf16 %v401, %v1035
      %v1046 = vmul.bf16 %v410, %v1035
      %v1047 = vmul.bf16 %v391, %v1035
      %v1048 = vmul.bf16 %v402, %v1035
      %v1049 = vmul.bf16 %v411, %v1035
      %v1050 = vmul.bf16 %v393, %v1035
      %v1051 = vmul.bf16 %v403, %v1035
      %v1052 = vmul.bf16 %v412, %v1035
      %v1053 = vmul.bf16 %v395, %v1035
      %v1054 = vmul.bf16 %v404, %v1035
      %v1073 = vrot.slane %v1037, 5
      %v1074 = vrot.slane %v1073, 4
      %v1075 = vrot.slane %v1038, 5
      %v1076 = vsel %vm718, %v1074, %v1075
      %v1077 = vrot.slane %v1075, 4
      %v1078 = vrot.slane %v1039, 5
      %v1079 = vsel %vm718, %v1077, %v1078
      %v1080 = vrot.slane %v1040, 5
      %v1081 = vrot.slane %v1080, 4
      %v1082 = vrot.slane %v1041, 5
      %v1083 = vsel %vm718, %v1081, %v1082
      %v1084 = vrot.slane %v1082, 4
      %v1085 = vrot.slane %v1042, 5
      %v1086 = vsel %vm718, %v1084, %v1085
      %v1087 = vrot.slane %v1043, 5
      %v1088 = vrot.slane %v1087, 4
      %v1089 = vrot.slane %v1044, 5
      %v1090 = vsel %vm718, %v1088, %v1089
      %v1091 = vrot.slane %v1089, 4
      %v1092 = vrot.slane %v1045, 5
      %v1093 = vsel %vm718, %v1091, %v1092
      %v1094 = vrot.slane %v1046, 5
      %v1095 = vrot.slane %v1094, 4
      %v1096 = vrot.slane %v1047, 5
      %v1097 = vsel %vm718, %v1095, %v1096
      %v1098 = vrot.slane %v1096, 4
      %v1099 = vrot.slane %v1048, 5
      %v1100 = vsel %vm718, %v1098, %v1099
      %v1101 = vrot.slane %v1049, 5
      %v1102 = vrot.slane %v1101, 4
      %v1103 = vrot.slane %v1050, 5
      %v1104 = vsel %vm718, %v1102, %v1103
      %v1105 = vrot.slane %v1103, 4
      %v1106 = vrot.slane %v1051, 5
      %v1107 = vsel %vm718, %v1105, %v1106
      %v1108 = vrot.slane %v1052, 5
      %v1109 = vrot.slane %v1108, 4
      %v1110 = vrot.slane %v1053, 5
      %v1111 = vsel %vm718, %v1109, %v1110
      %v1112 = vrot.slane %v1110, 4
      %v1113 = vrot.slane %v1054, 5
      %v1114 = vsel %vm718, %v1112, %v1113
      %v1127 = vadd.bf16 %v1011, %v1076
      %v1128 = vadd.bf16 %v1012, %v1079
      %v1129 = vadd.bf16 %v1013, %v1083
      %v1130 = vadd.bf16 %v1014, %v1086
      %v1131 = vadd.bf16 %v1015, %v1090
      %v1132 = vadd.bf16 %v1016, %v1093
      %v1133 = vadd.bf16 %v1017, %v1097
      %v1134 = vadd.bf16 %v1018, %v1100
      %v1135 = vadd.bf16 %v1019, %v1104
      %v1136 = vadd.bf16 %v1020, %v1107
      %v1137 = vadd.bf16 %v1021, %v1111
      %v1138 = vadd.bf16 %v1022, %v1114
      %v1139 = vlaneseq
      %v1140 = vshrl.u32 %v1139, 7
      %v1141 = vsub.s32 3, %v1140
      %v1142 = vrot.slane %v426, %v1141
      %v1143 = vlaneseq
      %v1144 = vshrl.u32 %v1143, 7
      %v1145 = vsub.s32 3, %v1144
      %v1146 = vrot.slane %v433, %v1145
      %v1149 = vunpack.c.l.b16 %v1142
      %v1150 = vunpack.c.l.b16 %v1146
      %v1151 = vpack.c.b16 %v1150, %v1149
      %v1153 = vmul.bf16 %v386, %v1151
      %v1154 = vmul.bf16 %v387, %v1151
      %v1155 = vmul.bf16 %v388, %v1151
      %v1156 = vmul.bf16 %v389, %v1151
      %v1157 = vmul.bf16 %v390, %v1151
      %v1158 = vmul.bf16 %v391, %v1151
      %v1159 = vmul.bf16 %v392, %v1151
      %v1160 = vmul.bf16 %v393, %v1151
      %v1161 = vmul.bf16 %v394, %v1151
      %v1162 = vmul.bf16 %v395, %v1151
      %v1163 = vmul.bf16 %v396, %v1151
      %v1164 = vmul.bf16 %v397, %v1151
      %v1165 = vadd.bf16 %v1127, %v1153
      %v1166 = vadd.bf16 %v1128, %v1154
      %v1167 = vadd.bf16 %v1129, %v1155
      %v1168 = vadd.bf16 %v1130, %v1156
      %v1169 = vadd.bf16 %v1131, %v1157
      %v1170 = vadd.bf16 %v1132, %v1158
      %v1171 = vadd.bf16 %v1133, %v1159
      %v1172 = vadd.bf16 %v1134, %v1160
      %v1173 = vadd.bf16 %v1135, %v1161
      %v1174 = vadd.bf16 %v1136, %v1162
      %v1175 = vadd.bf16 %v1137, %v1163
      %v1176 = vadd.bf16 %v1138, %v1164
      %v1177 = vlaneseq
      %v1178 = vshrl.u32 %v1177, 7
      %v1179 = vsub.s32 3, %v1178
      %v1180 = vrot.slane %v458, %v1179
      %v1181 = vlaneseq
      %v1182 = vshrl.u32 %v1181, 7
      %v1183 = vsub.s32 3, %v1182
      %v1184 = vrot.slane %v465, %v1183
      %v1187 = vunpack.c.l.b16 %v1180
      %v1188 = vunpack.c.l.b16 %v1184
      %v1189 = vpack.c.b16 %v1188, %v1187
      %v1191 = vmul.bf16 %v386, %v1189
      %v1192 = vmul.bf16 %v387, %v1189
      %v1193 = vmul.bf16 %v400, %v1189
      %v1194 = vmul.bf16 %v388, %v1189
      %v1195 = vmul.bf16 %v389, %v1189
      %v1196 = vmul.bf16 %v401, %v1189
      %v1197 = vmul.bf16 %v390, %v1189
      %v1198 = vmul.bf16 %v391, %v1189
      %v1199 = vmul.bf16 %v402, %v1189
      %v1200 = vmul.bf16 %v392, %v1189
      %v1201 = vmul.bf16 %v393, %v1189
      %v1202 = vmul.bf16 %v403, %v1189
      %v1203 = vmul.bf16 %v394, %v1189
      %v1204 = vmul.bf16 %v395, %v1189
      %v1205 = vmul.bf16 %v404, %v1189
      %v1206 = vmul.bf16 %v396, %v1189
      %v1207 = vmul.bf16 %v397, %v1189
      %v1208 = vmul.bf16 %v405, %v1189
      %v1210 = vshrl.u32 %v1191, 16
      %v1212 = vrot.slane %v1210, 4
      %v1213 = vshll.u32 %v1191, 16
      %v1215 = vrot.slane %v1213, 5
      %v1216 = vor.u32 %v1212, %v1215
      %v1217 = vrot.slane %v1216, 4
      %v1219 = vshll.u32 %v1192, 16
      %v1221 = vrot.slane %v1219, 5
      %v1222 = vsel %vm497, %v1217, %v1221
      %v1223 = vshrl.u32 %v1192, 16
      %v1225 = vrot.slane %v1223, 4
      %v1226 = vor.u32 %v1225, %v1221
      %v1227 = vrot.slane %v1226, 4
      %v1229 = vshll.u32 %v1193, 16
      %v1231 = vrot.slane %v1229, 5
      %v1232 = vsel %vm497, %v1227, %v1231
      %v1234 = vshrl.u32 %v1194, 16
      %v1236 = vrot.slane %v1234, 4
      %v1237 = vshll.u32 %v1194, 16
      %v1239 = vrot.slane %v1237, 5
      %v1240 = vor.u32 %v1236, %v1239
      %v1241 = vrot.slane %v1240, 4
      %v1243 = vshll.u32 %v1195, 16
      %v1245 = vrot.slane %v1243, 5
      %v1246 = vsel %vm497, %v1241, %v1245
      %v1247 = vshrl.u32 %v1195, 16
      %v1249 = vrot.slane %v1247, 4
      %v1250 = vor.u32 %v1249, %v1245
      %v1251 = vrot.slane %v1250, 4
      %v1253 = vshll.u32 %v1196, 16
      %v1255 = vrot.slane %v1253, 5
      %v1256 = vsel %vm497, %v1251, %v1255
      %v1258 = vshrl.u32 %v1197, 16
      %v1260 = vrot.slane %v1258, 4
      %v1261 = vshll.u32 %v1197, 16
      %v1263 = vrot.slane %v1261, 5
      %v1264 = vor.u32 %v1260, %v1263
      %v1265 = vrot.slane %v1264, 4
      %v1267 = vshll.u32 %v1198, 16
      %v1269 = vrot.slane %v1267, 5
      %v1270 = vsel %vm497, %v1265, %v1269
      %v1271 = vshrl.u32 %v1198, 16
      %v1273 = vrot.slane %v1271, 4
      %v1274 = vor.u32 %v1273, %v1269
      %v1275 = vrot.slane %v1274, 4
      %v1277 = vshll.u32 %v1199, 16
      %v1279 = vrot.slane %v1277, 5
      %v1280 = vsel %vm497, %v1275, %v1279
      %v1282 = vshrl.u32 %v1200, 16
      %v1284 = vrot.slane %v1282, 4
      %v1285 = vshll.u32 %v1200, 16
      %v1287 = vrot.slane %v1285, 5
      %v1288 = vor.u32 %v1284, %v1287
      %v1289 = vrot.slane %v1288, 4
      %v1291 = vshll.u32 %v1201, 16
      %v1293 = vrot.slane %v1291, 5
      %v1294 = vsel %vm497, %v1289, %v1293
      %v1295 = vshrl.u32 %v1201, 16
      %v1297 = vrot.slane %v1295, 4
      %v1298 = vor.u32 %v1297, %v1293
      %v1299 = vrot.slane %v1298, 4
      %v1301 = vshll.u32 %v1202, 16
      %v1303 = vrot.slane %v1301, 5
      %v1304 = vsel %vm497, %v1299, %v1303
      %v1306 = vshrl.u32 %v1203, 16
      %v1308 = vrot.slane %v1306, 4
      %v1309 = vshll.u32 %v1203, 16
      %v1311 = vrot.slane %v1309, 5
      %v1312 = vor.u32 %v1308, %v1311
      %v1313 = vrot.slane %v1312, 4
      %v1315 = vshll.u32 %v1204, 16
      %v1317 = vrot.slane %v1315, 5
      %v1318 = vsel %vm497, %v1313, %v1317
      %v1319 = vshrl.u32 %v1204, 16
      %v1321 = vrot.slane %v1319, 4
      %v1322 = vor.u32 %v1321, %v1317
      %v1323 = vrot.slane %v1322, 4
      %v1325 = vshll.u32 %v1205, 16
      %v1327 = vrot.slane %v1325, 5
      %v1328 = vsel %vm497, %v1323, %v1327
      %v1330 = vshrl.u32 %v1206, 16
      %v1332 = vrot.slane %v1330, 4
      %v1333 = vshll.u32 %v1206, 16
      %v1335 = vrot.slane %v1333, 5
      %v1336 = vor.u32 %v1332, %v1335
      %v1337 = vrot.slane %v1336, 4
      %v1339 = vshll.u32 %v1207, 16
      %v1341 = vrot.slane %v1339, 5
      %v1342 = vsel %vm497, %v1337, %v1341
      %v1343 = vshrl.u32 %v1207, 16
      %v1345 = vrot.slane %v1343, 4
      %v1346 = vor.u32 %v1345, %v1341
      %v1347 = vrot.slane %v1346, 4
      %v1349 = vshll.u32 %v1208, 16
      %v1351 = vrot.slane %v1349, 5
      %v1352 = vsel %vm497, %v1347, %v1351
      %v1365 = vadd.bf16 %v1165, %v1222
      %v1366 = vadd.bf16 %v1166, %v1232
      %v1367 = vadd.bf16 %v1167, %v1246
      %v1368 = vadd.bf16 %v1168, %v1256
      %v1369 = vadd.bf16 %v1169, %v1270
      %v1370 = vadd.bf16 %v1170, %v1280
      %v1371 = vadd.bf16 %v1171, %v1294
      %v1372 = vadd.bf16 %v1172, %v1304
      %v1373 = vadd.bf16 %v1173, %v1318
      %v1374 = vadd.bf16 %v1174, %v1328
      %v1375 = vadd.bf16 %v1175, %v1342
      %v1376 = vadd.bf16 %v1176, %v1352
      %v1378 = vunpack.c.l.b16 %v381
      %v1379 = vunpack.c.h.b16 %v381
      %v1380 = vpack.c.b16 %v1378, %v1378
      %v1381 = vpack.c.b16 %v1379, %v1379
      %v1383 = vpack.i.b16 %v1380, %v1380
      %v1385 = vlaneseq
      %v1386 = vshrl.u32 %v1385, 7
      %v1387 = vsub.s32 0, %v1386
      %v1388 = vrot.slane %v1383, %v1387
      %v1390 = vpack.i.b16 %v1381, %v1381
      %v1392 = vlaneseq
      %v1393 = vshrl.u32 %v1392, 7
      %v1394 = vsub.s32 0, %v1393
      %v1395 = vrot.slane %v1390, %v1394
      %v1398 = vunpack.c.l.b16 %v1388
      %v1399 = vunpack.c.l.b16 %v1395
      %v1400 = vpack.c.b16 %v1399, %v1398
      %v1402 = vmul.bf16 %v408, %v1400
      %v1403 = vmul.bf16 %v387, %v1400
      %v1404 = vmul.bf16 %v400, %v1400
      %v1405 = vmul.bf16 %v409, %v1400
      %v1406 = vmul.bf16 %v389, %v1400
      %v1407 = vmul.bf16 %v401, %v1400
      %v1408 = vmul.bf16 %v410, %v1400
      %v1409 = vmul.bf16 %v391, %v1400
      %v1410 = vmul.bf16 %v402, %v1400
      %v1411 = vmul.bf16 %v411, %v1400
      %v1412 = vmul.bf16 %v393, %v1400
      %v1413 = vmul.bf16 %v403, %v1400
      %v1414 = vmul.bf16 %v412, %v1400
      %v1415 = vmul.bf16 %v395, %v1400
      %v1416 = vmul.bf16 %v404, %v1400
      %v1417 = vmul.bf16 %v413, %v1400
      %v1418 = vmul.bf16 %v397, %v1400
      %v1419 = vmul.bf16 %v405, %v1400
      %v1438 = vrot.slane %v1402, 5
      %v1439 = vrot.slane %v1438, 4
      %v1440 = vrot.slane %v1403, 5
      %v1441 = vsel %vm718, %v1439, %v1440
      %v1442 = vrot.slane %v1440, 4
      %v1443 = vrot.slane %v1404, 5
      %v1444 = vsel %vm718, %v1442, %v1443
      %v1445 = vrot.slane %v1405, 5
      %v1446 = vrot.slane %v1445, 4
      %v1447 = vrot.slane %v1406, 5
      %v1448 = vsel %vm718, %v1446, %v1447
      %v1449 = vrot.slane %v1447, 4
      %v1450 = vrot.slane %v1407, 5
      %v1451 = vsel %vm718, %v1449, %v1450
      %v1452 = vrot.slane %v1408, 5
      %v1453 = vrot.slane %v1452, 4
      %v1454 = vrot.slane %v1409, 5
      %v1455 = vsel %vm718, %v1453, %v1454
      %v1456 = vrot.slane %v1454, 4
      %v1457 = vrot.slane %v1410, 5
      %v1458 = vsel %vm718, %v1456, %v1457
      %v1459 = vrot.slane %v1411, 5
      %v1460 = vrot.slane %v1459, 4
      %v1461 = vrot.slane %v1412, 5
      %v1462 = vsel %vm718, %v1460, %v1461
      %v1463 = vrot.slane %v1461, 4
      %v1464 = vrot.slane %v1413, 5
      %v1465 = vsel %vm718, %v1463, %v1464
      %v1466 = vrot.slane %v1414, 5
      %v1467 = vrot.slane %v1466, 4
      %v1468 = vrot.slane %v1415, 5
      %v1469 = vsel %vm718, %v1467, %v1468
      %v1470 = vrot.slane %v1468, 4
      %v1471 = vrot.slane %v1416, 5
      %v1472 = vsel %vm718, %v1470, %v1471
      %v1473 = vrot.slane %v1417, 5
      %v1474 = vrot.slane %v1473, 4
      %v1475 = vrot.slane %v1418, 5
      %v1476 = vsel %vm718, %v1474, %v1475
      %v1477 = vrot.slane %v1475, 4
      %v1478 = vrot.slane %v1419, 5
      %v1479 = vsel %vm718, %v1477, %v1478
      %v1492 = vadd.bf16 %v1365, %v1441
      %v1493 = vadd.bf16 %v1366, %v1444
      %v1494 = vadd.bf16 %v1367, %v1448
      %v1495 = vadd.bf16 %v1368, %v1451
      %v1496 = vadd.bf16 %v1369, %v1455
      %v1497 = vadd.bf16 %v1370, %v1458
      %v1498 = vadd.bf16 %v1371, %v1462
      %v1499 = vadd.bf16 %v1372, %v1465
      %v1500 = vadd.bf16 %v1373, %v1469
      %v1501 = vadd.bf16 %v1374, %v1472
      %v1502 = vadd.bf16 %v1375, %v1476
      %v1503 = vadd.bf16 %v1376, %v1479
      %v1504 = vmul.bf16 %v394, %v443
      %v1505 = vmul.bf16 %v395, %v443
      %v1506 = vmul.bf16 %v396, %v443
      %v1507 = vmul.bf16 %v397, %v443
      %v1508 = vmul.bf16 %v394, %v475
      %v1509 = vmul.bf16 %v395, %v475
      %v1510 = vmul.bf16 %v404, %v475
      %v1511 = vmul.bf16 %v396, %v475
      %v1512 = vmul.bf16 %v397, %v475
      %v1513 = vmul.bf16 %v405, %v475
      %v1515 = vshrl.u32 %v1508, 16
      %v1517 = vrot.slane %v1515, 4
      %v1518 = vshll.u32 %v1508, 16
      %v1520 = vrot.slane %v1518, 5
      %v1521 = vor.u32 %v1517, %v1520
      %v1522 = vrot.slane %v1521, 4
      %v1524 = vshll.u32 %v1509, 16
      %v1526 = vrot.slane %v1524, 5
      %v1527 = vsel %vm497, %v1522, %v1526
      %v1528 = vshrl.u32 %v1509, 16
      %v1530 = vrot.slane %v1528, 4
      %v1531 = vor.u32 %v1530, %v1526
      %v1532 = vrot.slane %v1531, 4
      %v1534 = vshll.u32 %v1510, 16
      %v1536 = vrot.slane %v1534, 5
      %v1537 = vsel %vm497, %v1532, %v1536
      %v1539 = vshrl.u32 %v1511, 16
      %v1541 = vrot.slane %v1539, 4
      %v1542 = vshll.u32 %v1511, 16
      %v1544 = vrot.slane %v1542, 5
      %v1545 = vor.u32 %v1541, %v1544
      %v1546 = vrot.slane %v1545, 4
      %v1548 = vshll.u32 %v1512, 16
      %v1550 = vrot.slane %v1548, 5
      %v1551 = vsel %vm497, %v1546, %v1550
      %v1552 = vshrl.u32 %v1512, 16
      %v1554 = vrot.slane %v1552, 4
      %v1555 = vor.u32 %v1554, %v1550
      %v1556 = vrot.slane %v1555, 4
      %v1558 = vshll.u32 %v1513, 16
      %v1560 = vrot.slane %v1558, 5
      %v1561 = vsel %vm497, %v1556, %v1560
      %v1566 = vadd.bf16 %v1504, %v1527
      %v1567 = vadd.bf16 %v1505, %v1537
      %v1568 = vadd.bf16 %v1506, %v1551
      %v1569 = vadd.bf16 %v1507, %v1561
      %v1570 = vmul.bf16 %v412, %v678
      %v1571 = vmul.bf16 %v395, %v678
      %v1572 = vmul.bf16 %v404, %v678
      %v1573 = vmul.bf16 %v413, %v678
      %v1574 = vmul.bf16 %v397, %v678
      %v1575 = vmul.bf16 %v405, %v678
      %v1582 = vrot.slane %v1570, 5
      %v1583 = vrot.slane %v1582, 4
      %v1584 = vrot.slane %v1571, 5
      %v1585 = vsel %vm718, %v1583, %v1584
      %v1586 = vrot.slane %v1584, 4
      %v1587 = vrot.slane %v1572, 5
      %v1588 = vsel %vm718, %v1586, %v1587
      %v1589 = vrot.slane %v1573, 5
      %v1590 = vrot.slane %v1589, 4
      %v1591 = vrot.slane %v1574, 5
      %v1592 = vsel %vm718, %v1590, %v1591
      %v1593 = vrot.slane %v1591, 4
      %v1594 = vrot.slane %v1575, 5
      %v1595 = vsel %vm718, %v1593, %v1594
      %v1600 = vadd.bf16 %v1566, %v1585
      %v1601 = vadd.bf16 %v1567, %v1588
      %v1602 = vadd.bf16 %v1568, %v1592
      %v1603 = vadd.bf16 %v1569, %v1595
      %v1604 = vmul.bf16 %v396, %v797
      %v1605 = vmul.bf16 %v397, %v797
      %v1606 = vmul.bf16 %v414, %v797
      %v1607 = vmul.bf16 %v415, %v797
      %v1608 = vadd.bf16 %v1600, %v1604
      %v1609 = vadd.bf16 %v1601, %v1605
      %v1610 = vadd.bf16 %v1602, %v1606
      %v1611 = vadd.bf16 %v1603, %v1607
      %v1612 = vmul.bf16 %v396, %v835
      %v1613 = vmul.bf16 %v397, %v835
      %v1614 = vmul.bf16 %v405, %v835
      %v1615 = vmul.bf16 %v414, %v835
      %v1616 = vmul.bf16 %v415, %v835
      %v1617 = vmul.bf16 %v416, %v835
      %v1619 = vshrl.u32 %v1612, 16
      %v1621 = vrot.slane %v1619, 4
      %v1622 = vshll.u32 %v1612, 16
      %v1624 = vrot.slane %v1622, 5
      %v1625 = vor.u32 %v1621, %v1624
      %v1626 = vrot.slane %v1625, 4
      %v1628 = vshll.u32 %v1613, 16
      %v1630 = vrot.slane %v1628, 5
      %v1631 = vsel %vm497, %v1626, %v1630
      %v1632 = vshrl.u32 %v1613, 16
      %v1634 = vrot.slane %v1632, 4
      %v1635 = vor.u32 %v1634, %v1630
      %v1636 = vrot.slane %v1635, 4
      %v1638 = vshll.u32 %v1614, 16
      %v1640 = vrot.slane %v1638, 5
      %v1641 = vsel %vm497, %v1636, %v1640
      %v1643 = vshrl.u32 %v1615, 16
      %v1645 = vrot.slane %v1643, 4
      %v1646 = vshll.u32 %v1615, 16
      %v1648 = vrot.slane %v1646, 5
      %v1649 = vor.u32 %v1645, %v1648
      %v1650 = vrot.slane %v1649, 4
      %v1652 = vshll.u32 %v1616, 16
      %v1654 = vrot.slane %v1652, 5
      %v1655 = vsel %vm497, %v1650, %v1654
      %v1656 = vshrl.u32 %v1616, 16
      %v1658 = vrot.slane %v1656, 4
      %v1659 = vor.u32 %v1658, %v1654
      %v1660 = vrot.slane %v1659, 4
      %v1662 = vshll.u32 %v1617, 16
      %v1664 = vrot.slane %v1662, 5
      %v1665 = vsel %vm497, %v1660, %v1664
      %v1670 = vadd.bf16 %v1608, %v1631
      %v1671 = vadd.bf16 %v1609, %v1641
      %v1672 = vadd.bf16 %v1610, %v1655
      %v1673 = vadd.bf16 %v1611, %v1665
      %v1674 = vmul.bf16 %v413, %v1035
      %v1675 = vmul.bf16 %v397, %v1035
      %v1676 = vmul.bf16 %v405, %v1035
      %v1677 = vmul.bf16 %v414, %v1035
      %v1678 = vmul.bf16 %v415, %v1035
      %v1679 = vmul.bf16 %v416, %v1035
      %v1686 = vrot.slane %v1674, 5
      %v1687 = vrot.slane %v1686, 4
      %v1688 = vrot.slane %v1675, 5
      %v1689 = vsel %vm718, %v1687, %v1688
      %v1690 = vrot.slane %v1688, 4
      %v1691 = vrot.slane %v1676, 5
      %v1692 = vsel %vm718, %v1690, %v1691
      %v1693 = vrot.slane %v1677, 5
      %v1694 = vrot.slane %v1693, 4
      %v1695 = vrot.slane %v1678, 5
      %v1696 = vsel %vm718, %v1694, %v1695
      %v1697 = vrot.slane %v1695, 4
      %v1698 = vrot.slane %v1679, 5
      %v1699 = vsel %vm718, %v1697, %v1698
      %v1704 = vadd.bf16 %v1670, %v1689
      %v1705 = vadd.bf16 %v1671, %v1692
      %v1706 = vadd.bf16 %v1672, %v1696
      %v1707 = vadd.bf16 %v1673, %v1699
      %v1708 = vmul.bf16 %v414, %v1151
      %v1709 = vmul.bf16 %v415, %v1151
      %v1710 = vmul.bf16 %v417, %v1151
      %v1711 = vmul.bf16 %v418, %v1151
      %v1712 = vadd.bf16 %v1704, %v1708
      %v1713 = vadd.bf16 %v1705, %v1709
      %v1714 = vadd.bf16 %v1706, %v1710
      %v1715 = vadd.bf16 %v1707, %v1711
      %v1716 = vmul.bf16 %v414, %v1189
      %v1717 = vmul.bf16 %v415, %v1189
      %v1718 = vmul.bf16 %v416, %v1189
      %v1719 = vmul.bf16 %v417, %v1189
      %v1720 = vmul.bf16 %v418, %v1189
      %v1721 = vmul.bf16 %v419, %v1189
      %v1723 = vshrl.u32 %v1716, 16
      %v1725 = vrot.slane %v1723, 4
      %v1726 = vshll.u32 %v1716, 16
      %v1728 = vrot.slane %v1726, 5
      %v1729 = vor.u32 %v1725, %v1728
      %v1730 = vrot.slane %v1729, 4
      %v1732 = vshll.u32 %v1717, 16
      %v1734 = vrot.slane %v1732, 5
      %v1735 = vsel %vm497, %v1730, %v1734
      %v1736 = vshrl.u32 %v1717, 16
      %v1738 = vrot.slane %v1736, 4
      %v1739 = vor.u32 %v1738, %v1734
      %v1740 = vrot.slane %v1739, 4
      %v1742 = vshll.u32 %v1718, 16
      %v1744 = vrot.slane %v1742, 5
      %v1745 = vsel %vm497, %v1740, %v1744
      %v1747 = vshrl.u32 %v1719, 16
      %v1749 = vrot.slane %v1747, 4
      %v1750 = vshll.u32 %v1719, 16
      %v1752 = vrot.slane %v1750, 5
      %v1753 = vor.u32 %v1749, %v1752
      %v1754 = vrot.slane %v1753, 4
      %v1756 = vshll.u32 %v1720, 16
      %v1758 = vrot.slane %v1756, 5
      %v1759 = vsel %vm497, %v1754, %v1758
      %v1760 = vshrl.u32 %v1720, 16
      %v1762 = vrot.slane %v1760, 4
      %v1763 = vor.u32 %v1762, %v1758
      %v1764 = vrot.slane %v1763, 4
      %v1766 = vshll.u32 %v1721, 16
      %v1768 = vrot.slane %v1766, 5
      %v1769 = vsel %vm497, %v1764, %v1768
      %v1774 = vadd.bf16 %v1712, %v1735
      %v1775 = vadd.bf16 %v1713, %v1745
      %v1776 = vadd.bf16 %v1714, %v1759
      %v1777 = vadd.bf16 %v1715, %v1769
      %v1778 = vmul.bf16 %v414, %v1400
      %v1779 = vmul.bf16 %v415, %v1400
      %v1780 = vmul.bf16 %v416, %v1400
      %v1781 = vmul.bf16 %v417, %v1400
      %v1782 = vmul.bf16 %v418, %v1400
      %v1783 = vmul.bf16 %v419, %v1400
      %v1790 = vrot.slane %v1778, 5
      %v1791 = vrot.slane %v1790, 4
      %v1792 = vrot.slane %v1779, 5
      %v1793 = vsel %vm718, %v1791, %v1792
      %v1794 = vrot.slane %v1792, 4
      %v1795 = vrot.slane %v1780, 5
      %v1796 = vsel %vm718, %v1794, %v1795
      %v1797 = vrot.slane %v1781, 5
      %v1798 = vrot.slane %v1797, 4
      %v1799 = vrot.slane %v1782, 5
      %v1800 = vsel %vm718, %v1798, %v1799
      %v1801 = vrot.slane %v1799, 4
      %v1802 = vrot.slane %v1783, 5
      %v1803 = vsel %vm718, %v1801, %v1802
      %v1808 = vadd.bf16 %v1774, %v1793
      %v1809 = vadd.bf16 %v1775, %v1796
      %v1810 = vadd.bf16 %v1776, %v1800
      %v1811 = vadd.bf16 %v1777, %v1803
      %v1812 = vld [vmem:[%s3] sm:$0xff]
      %v1813 = vld [vmem:[%s3 + $0x8] sm:$0xff]
      %v1814 = vld [vmem:[%s3 + $0x10] sm:$0xff]
      %v1815 = vld [vmem:[%s3 + $0x18] sm:$0xff]
      %v1816 = vld [vmem:[%s3 + $0x20] sm:$0xff]
      %v1817 = vld [vmem:[%s3 + $0x28] sm:$0xff]
      %v1818 = vld [vmem:[%s3 + $0x30] sm:$0xff]
      %v1819 = vld [vmem:[%s3 + $0x38] sm:$0xff]
      %v1820 = vld [vmem:[%s3 + $0x40] sm:$0xff]
      %v1821 = vld [vmem:[%s3 + $0x48] sm:$0xff]
      %v1822 = vld [vmem:[%s3 + $0x50] sm:$0xff]
      %v1823 = vld [vmem:[%s3 + $0x58] sm:$0xff]
      %v1824 = vld [vmem:[%s3 + $0x60] sm:$0xff]
      %v1825 = vld [vmem:[%s3 + $0x68] sm:$0xff]
      %v1826 = vld [vmem:[%s3 + $0x70] sm:$0xff]
      %v1827 = vld [vmem:[%s3 + $0x78] sm:$0xff]
      %v1828 = vld [vmem:[%s3 + $0x80] sm:$0xff]
      %v1829 = vld [vmem:[%s3 + $0x88] sm:$0xff]
      %v1830 = vld [vmem:[%s3 + $0x90] sm:$0xff]
      %v1831 = vld [vmem:[%s3 + $0x98] sm:$0xff]
      %v1832 = vld [vmem:[%s3 + $0xa0] sm:$0xff]
      %v1833 = vld [vmem:[%s3 + $0xa8] sm:$0xff]
      %v1834 = vld [vmem:[%s3 + $0xb0] sm:$0xff]
      %v1835 = vld [vmem:[%s3 + $0xb8] sm:$0xff]
      %v1836 = vld [vmem:[%s3 + $0xc0] sm:$0xff]
      %v1837 = vld [vmem:[%s3 + $0xc8] sm:$0xff]
      %v1838 = vld [vmem:[%s3 + $0xd0] sm:$0xff]
      %v1839 = vld [vmem:[%s3 + $0xd8] sm:$0xff]
      %v1840 = vld [vmem:[%s3 + $0xe0] sm:$0xff]
      %v1841 = vld [vmem:[%s3 + $0xe8] sm:$0xff]
      %v1842 = vld [vmem:[%s3 + $0xf0] sm:$0xff]
      %v1843 = vld [vmem:[%s3 + $0xf8] sm:$0xff]
      %v1844 = vld [vmem:[%s4] sm:$0x3]
      %v1845 = vld [vmem:[%s5] sm:$0xf]
      %v1846 = vld [vmem:[%s5 + $0x4] sm:$0xf]
      %v1847 = vld [vmem:[%s5 + $0x8] sm:$0xf]
      %v1848 = vld [vmem:[%s5 + $0xc] sm:$0xf]
      %v1849 = vld [vmem:[%s5 + $0x10] sm:$0xf]
      %v1850 = vld [vmem:[%s5 + $0x14] sm:$0xf]
      %v1851 = vld [vmem:[%s5 + $0x18] sm:$0xf]
      %v1852 = vld [vmem:[%s5 + $0x1c] sm:$0xf]
      %v1853 = vld [vmem:[%s5 + $0x20] sm:$0xf]
      %v1854 = vld [vmem:[%s5 + $0x24] sm:$0xf]
      %v1855 = vld [vmem:[%s5 + $0x28] sm:$0xf]
      %v1856 = vld [vmem:[%s5 + $0x2c] sm:$0xf]
      %v1857 = vld [vmem:[%s5 + $0x30] sm:$0xf]
      %v1858 = vld [vmem:[%s5 + $0x34] sm:$0xf]
      %v1859 = vld [vmem:[%s5 + $0x38] sm:$0xf]
      %v1860 = vld [vmem:[%s5 + $0x3c] sm:$0xf]
      %v1861 = vld [vmem:[%s5 + $0x40] sm:$0xf]
      %v1862 = vld [vmem:[%s5 + $0x44] sm:$0xf]
      %v1863 = vld [vmem:[%s5 + $0x48] sm:$0xf]
      %v1864 = vld [vmem:[%s5 + $0x4c] sm:$0xf]
      %v1865 = vld [vmem:[%s5 + $0x50] sm:$0xf]
      %v1866 = vld [vmem:[%s5 + $0x54] sm:$0xf]
      %v1867 = vld [vmem:[%s5 + $0x58] sm:$0xf]
      %v1868 = vld [vmem:[%s5 + $0x5c] sm:$0xf]
      %v1869 = vld [vmem:[%s5 + $0x60] sm:$0xf]
      %v1870 = vld [vmem:[%s5 + $0x64] sm:$0xf]
      %v1871 = vld [vmem:[%s5 + $0x68] sm:$0xf]
      %v1872 = vld [vmem:[%s5 + $0x6c] sm:$0xf]
      %v1873 = vld [vmem:[%s5 + $0x70] sm:$0xf]
      %v1874 = vld [vmem:[%s5 + $0x74] sm:$0xf]
      %v1875 = vld [vmem:[%s5 + $0x78] sm:$0xf]
      %v1876 = vld [vmem:[%s5 + $0x7c] sm:$0xf]
      %v1878 = vlaneseq
      %v1879 = vshrl.u32 %v1878, 7
      %v1880 = vsub.s32 0, %v1879
      %v1881 = vrot.slane %v1844, %v1880
      %v1882 = vlaneseq
      %v1883 = vshrl.u32 %v1882, 7
      %v1884 = vsub.s32 1, %v1883
      %v1885 = vrot.slane %v1844, %v1884
      %v1900 = vunpack.c.l.b16 %v1492
      %v1901 = vunpack.c.h.b16 %v1492
      %v1902 = vunpack.c.l.b16 %v1493
      %v1903 = vunpack.c.h.b16 %v1493
      %v1904 = vunpack.c.l.b16 %v1494
      %v1905 = vunpack.c.h.b16 %v1494
      %v1906 = vunpack.c.l.b16 %v1495
      %v1907 = vunpack.c.h.b16 %v1495
      %v1908 = vunpack.c.l.b16 %v1496
      %v1909 = vunpack.c.h.b16 %v1496
      %v1910 = vunpack.c.l.b16 %v1497
      %v1911 = vunpack.c.h.b16 %v1497
      %v1912 = vunpack.c.l.b16 %v1498
      %v1913 = vunpack.c.h.b16 %v1498
      %v1914 = vunpack.c.l.b16 %v1499
      %v1915 = vunpack.c.h.b16 %v1499
      %v1916 = vunpack.c.l.b16 %v1500
      %v1917 = vunpack.c.h.b16 %v1500
      %v1918 = vunpack.c.l.b16 %v1501
      %v1919 = vunpack.c.h.b16 %v1501
      %v1920 = vunpack.c.l.b16 %v1502
      %v1921 = vunpack.c.h.b16 %v1502
      %v1922 = vunpack.c.l.b16 %v1503
      %v1923 = vunpack.c.h.b16 %v1503
      %v1924 = vpack.c.b16 %v1902, %v1900
      %v1925 = vpack.c.b16 %v1903, %v1901
      %v1926 = vpack.c.b16 %v1906, %v1904
      %v1927 = vpack.c.b16 %v1907, %v1905
      %v1928 = vpack.c.b16 %v1910, %v1908
      %v1929 = vpack.c.b16 %v1911, %v1909
      %v1930 = vpack.c.b16 %v1914, %v1912
      %v1931 = vpack.c.b16 %v1915, %v1913
      %v1932 = vpack.c.b16 %v1918, %v1916
      %v1933 = vpack.c.b16 %v1919, %v1917
      %v1934 = vpack.c.b16 %v1922, %v1920
      %v1935 = vpack.c.b16 %v1923, %v1921
      %v1980 = vunpack.c.l.b16 %v1812
      %v1981 = vunpack.c.h.b16 %v1812
      %v1982 = vunpack.c.l.b16 %v1813
      %v1983 = vunpack.c.h.b16 %v1813
      %v1984 = vunpack.c.l.b16 %v1814
      %v1985 = vunpack.c.h.b16 %v1814
      %v1986 = vunpack.c.l.b16 %v1815
      %v1987 = vunpack.c.h.b16 %v1815
      %v1988 = vunpack.c.l.b16 %v1816
      %v1989 = vunpack.c.h.b16 %v1816
      %v1990 = vunpack.c.l.b16 %v1817
      %v1991 = vunpack.c.h.b16 %v1817
      %v1992 = vunpack.c.l.b16 %v1818
      %v1993 = vunpack.c.h.b16 %v1818
      %v1994 = vunpack.c.l.b16 %v1819
      %v1995 = vunpack.c.h.b16 %v1819
      %v1996 = vunpack.c.l.b16 %v1820
      %v1997 = vunpack.c.h.b16 %v1820
      %v1998 = vunpack.c.l.b16 %v1821
      %v1999 = vunpack.c.h.b16 %v1821
      %v2000 = vunpack.c.l.b16 %v1822
      %v2001 = vunpack.c.h.b16 %v1822
      %v2002 = vunpack.c.l.b16 %v1823
      %v2003 = vunpack.c.h.b16 %v1823
      %v2004 = vunpack.c.l.b16 %v1824
      %v2005 = vunpack.c.h.b16 %v1824
      %v2006 = vunpack.c.l.b16 %v1825
      %v2007 = vunpack.c.h.b16 %v1825
      %v2008 = vunpack.c.l.b16 %v1826
      %v2009 = vunpack.c.h.b16 %v1826
      %v2010 = vunpack.c.l.b16 %v1827
      %v2011 = vunpack.c.h.b16 %v1827
      %v2012 = vunpack.c.l.b16 %v1828
      %v2013 = vunpack.c.h.b16 %v1828
      %v2014 = vunpack.c.l.b16 %v1829
      %v2015 = vunpack.c.h.b16 %v1829
      %v2016 = vunpack.c.l.b16 %v1830
      %v2017 = vunpack.c.h.b16 %v1830
      %v2018 = vunpack.c.l.b16 %v1831
      %v2019 = vunpack.c.h.b16 %v1831
      %v2020 = vunpack.c.l.b16 %v1832
      %v2021 = vunpack.c.h.b16 %v1832
      %v2022 = vunpack.c.l.b16 %v1833
      %v2023 = vunpack.c.h.b16 %v1833
      %v2024 = vunpack.c.l.b16 %v1834
      %v2025 = vunpack.c.h.b16 %v1834
      %v2026 = vunpack.c.l.b16 %v1835
      %v2027 = vunpack.c.h.b16 %v1835
      %v2028 = vunpack.c.l.b16 %v1836
      %v2029 = vunpack.c.h.b16 %v1836
      %v2030 = vunpack.c.l.b16 %v1837
      %v2031 = vunpack.c.h.b16 %v1837
      %v2032 = vunpack.c.l.b16 %v1838
      %v2033 = vunpack.c.h.b16 %v1838
      %v2034 = vunpack.c.l.b16 %v1839
      %v2035 = vunpack.c.h.b16 %v1839
      %v2036 = vunpack.c.l.b16 %v1840
      %v2037 = vunpack.c.h.b16 %v1840
      %v2038 = vunpack.c.l.b16 %v1841
      %v2039 = vunpack.c.h.b16 %v1841
      %v2040 = vunpack.c.l.b16 %v1842
      %v2041 = vunpack.c.h.b16 %v1842
      %v2042 = vunpack.c.l.b16 %v1843
      %v2043 = vunpack.c.h.b16 %v1843
      %v2044 = vpack.c.b16 %v1982, %v1980
      %v2045 = vpack.c.b16 %v1983, %v1981
      %v2046 = vpack.c.b16 %v1986, %v1984
      %v2047 = vpack.c.b16 %v1987, %v1985
      %v2048 = vpack.c.b16 %v1990, %v1988
      %v2049 = vpack.c.b16 %v1991, %v1989
      %v2050 = vpack.c.b16 %v1994, %v1992
      %v2051 = vpack.c.b16 %v1995, %v1993
      %v2052 = vpack.c.b16 %v1998, %v1996
      %v2053 = vpack.c.b16 %v1999, %v1997
      %v2054 = vpack.c.b16 %v2002, %v2000
      %v2055 = vpack.c.b16 %v2003, %v2001
      %v2056 = vpack.c.b16 %v2006, %v2004
      %v2057 = vpack.c.b16 %v2007, %v2005
      %v2058 = vpack.c.b16 %v2010, %v2008
      %v2059 = vpack.c.b16 %v2011, %v2009
      %v2060 = vpack.c.b16 %v2014, %v2012
      %v2061 = vpack.c.b16 %v2015, %v2013
      %v2062 = vpack.c.b16 %v2018, %v2016
      %v2063 = vpack.c.b16 %v2019, %v2017
      %v2064 = vpack.c.b16 %v2022, %v2020
      %v2065 = vpack.c.b16 %v2023, %v2021
      %v2066 = vpack.c.b16 %v2026, %v2024
      %v2067 = vpack.c.b16 %v2027, %v2025
      %v2068 = vpack.c.b16 %v2030, %v2028
      %v2069 = vpack.c.b16 %v2031, %v2029
      %v2070 = vpack.c.b16 %v2034, %v2032
      %v2071 = vpack.c.b16 %v2035, %v2033
      %v2072 = vpack.c.b16 %v2038, %v2036
      %v2073 = vpack.c.b16 %v2039, %v2037
      %v2074 = vpack.c.b16 %v2042, %v2040
      %v2075 = vpack.c.b16 %v2043, %v2041
      %2108 = vmatprep.subr.bf16.mxu0 %v2059
      %2109 = vmatpush1.bf16.msra.mxu0 %v2058
      %2110 = vmatprep.subr.bf16.mxu0 %v2057
      %2111 = vmatpush1.bf16.msra.mxu0 %v2056
      %2112 = vmatprep.subr.bf16.mxu0 %v2055
      %2113 = vmatpush1.bf16.msra.mxu0 %v2054
      %2114 = vmatprep.subr.bf16.mxu0 %v2053
      %2115 = vmatpush1.bf16.msra.mxu0 %v2052
      %2116 = vmatprep.subr.bf16.mxu0 %v2051
      %2117 = vmatpush1.bf16.msra.mxu0 %v2050
      %2118 = vmatprep.subr.bf16.mxu0 %v2049
      %2119 = vmatpush1.bf16.msra.mxu0 %v2048
      %2120 = vmatprep.subr.bf16.mxu0 %v2047
      %2121 = vmatpush1.bf16.msra.mxu0 %v2046
      %2122 = vmatprep.subr.bf16.mxu0 %v2045
      %2123 = vmatpush1.bf16.msra.mxu0 %v2044
      %2124 = vmatprep.subr.bf16.mxu0 %v2075
      %2125 = vmatpush2.bf16.msra.mxu0 %v2074
      %2126 = vmatprep.subr.bf16.mxu0 %v2073
      %2127 = vmatpush2.bf16.msra.mxu0 %v2072
      %2128 = vmatprep.subr.bf16.mxu0 %v2071
      %2129 = vmatpush2.bf16.msra.mxu0 %v2070
      %2130 = vmatprep.subr.bf16.mxu0 %v2069
      %2131 = vmatpush2.bf16.msra.mxu0 %v2068
      %2132 = vmatprep.subr.bf16.mxu0 %v2067
      %2133 = vmatpush2.bf16.msra.mxu0 %v2066
      %2134 = vmatprep.subr.bf16.mxu0 %v2065
      %2135 = vmatpush2.bf16.msra.mxu0 %v2064
      %2136 = vmatprep.subr.bf16.mxu0 %v2063
      %2137 = vmatpush2.bf16.msra.mxu0 %v2062
      %2138 = vmatprep.subr.bf16.mxu0 %v2061
      %2139 = vmatpush2.bf16.msra.mxu0 %v2060
      %2140 = vmatprep.mubr.bf16.mxu0 %v1925
      %2141 = vmatmul.mubr.bf16.gmra.mxu0 %v1924
      %v2142 = vpop.f32.mrf.mxu0
      %v2143 = vadd.f32 %v1881, %v2142
      %v2144 = vpop.f32.mrf.mxu0
      %v2145 = vadd.f32 %v1885, %v2144
      %v2146 = vpop.f32.mrf.mxu0
      %v2147 = vadd.f32 %v1881, %v2146
      %v2148 = vpop.f32.mrf.mxu0
      %v2149 = vadd.f32 %v1885, %v2148
      %2150 = vmatprep.mubr.bf16.mxu0 %v1927
      %2151 = vmatmul.mubr.bf16.gmra.mxu0 %v1926
      %v2152 = vpop.f32.mrf.mxu0
      %v2153 = vadd.f32 %v1881, %v2152
      %v2154 = vpop.f32.mrf.mxu0
      %v2155 = vadd.f32 %v1885, %v2154
      %v2156 = vpop.f32.mrf.mxu0
      %v2157 = vadd.f32 %v1881, %v2156
      %v2158 = vpop.f32.mrf.mxu0
      %v2159 = vadd.f32 %v1885, %v2158
      %2160 = vmatprep.mubr.bf16.mxu0 %v1929
      %2161 = vmatmul.mubr.bf16.gmra.mxu0 %v1928
      %v2162 = vpop.f32.mrf.mxu0
      %v2163 = vadd.f32 %v1881, %v2162
      %v2164 = vpop.f32.mrf.mxu0
      %v2165 = vadd.f32 %v1885, %v2164
      %v2166 = vpop.f32.mrf.mxu0
      %v2167 = vadd.f32 %v1881, %v2166
      %v2168 = vpop.f32.mrf.mxu0
      %v2169 = vadd.f32 %v1885, %v2168
      %2170 = vmatprep.mubr.bf16.mxu0 %v1931
      %2171 = vmatmul.mubr.bf16.gmra.mxu0 %v1930
      %v2172 = vpop.f32.mrf.mxu0
      %v2173 = vadd.f32 %v1881, %v2172
      %v2174 = vpop.f32.mrf.mxu0
      %v2175 = vadd.f32 %v1885, %v2174
      %v2176 = vpop.f32.mrf.mxu0
      %v2177 = vadd.f32 %v1881, %v2176
      %v2178 = vpop.f32.mrf.mxu0
      %v2179 = vadd.f32 %v1885, %v2178
      %2180 = vmatprep.mubr.bf16.mxu0 %v1933
      %2181 = vmatmul.mubr.bf16.gmra.mxu0 %v1932
      %v2182 = vpop.f32.mrf.mxu0
      %v2183 = vadd.f32 %v1881, %v2182
      %v2184 = vpop.f32.mrf.mxu0
      %v2185 = vadd.f32 %v1885, %v2184
      %v2186 = vpop.f32.mrf.mxu0
      %v2187 = vadd.f32 %v1881, %v2186
      %v2188 = vpop.f32.mrf.mxu0
      %v2189 = vadd.f32 %v1885, %v2188
      %2190 = vmatprep.mubr.bf16.mxu0 %v1935
      %2191 = vmatmul.mubr.bf16.gmra.mxu0 %v1934
      %v2192 = vpop.f32.mrf.mxu0
      %v2193 = vadd.f32 %v1881, %v2192
      %v2194 = vpop.f32.mrf.mxu0
      %v2195 = vadd.f32 %v1885, %v2194
      %v2196 = vpop.f32.mrf.mxu0
      %v2197 = vadd.f32 %v1881, %v2196
      %v2198 = vpop.f32.mrf.mxu0
      %v2199 = vadd.f32 %v1885, %v2198
      %2200 = vdwg.mxu0
      %v2201 = vmax.f32 %v2143, 0.0
      %v2202 = vmax.f32 %v2145, 0.0
      %v2203 = vmax.f32 %v2147, 0.0
      %v2204 = vmax.f32 %v2149, 0.0
      %v2205 = vmax.f32 %v2153, 0.0
      %v2206 = vmax.f32 %v2155, 0.0
      %v2207 = vmax.f32 %v2157, 0.0
      %v2208 = vmax.f32 %v2159, 0.0
      %v2209 = vmax.f32 %v2163, 0.0
      %v2210 = vmax.f32 %v2165, 0.0
      %v2211 = vmax.f32 %v2167, 0.0
      %v2212 = vmax.f32 %v2169, 0.0
      %v2213 = vmax.f32 %v2173, 0.0
      %v2214 = vmax.f32 %v2175, 0.0
      %v2215 = vmax.f32 %v2177, 0.0
      %v2216 = vmax.f32 %v2179, 0.0
      %v2217 = vmax.f32 %v2183, 0.0
      %v2218 = vmax.f32 %v2185, 0.0
      %v2219 = vmax.f32 %v2187, 0.0
      %v2220 = vmax.f32 %v2189, 0.0
      %v2221 = vmax.f32 %v2193, 0.0
      %v2222 = vmax.f32 %v2195, 0.0
      %v2223 = vmax.f32 %v2197, 0.0
      %v2224 = vmax.f32 %v2199, 0.0
      %v2225 = vmin.f32 %v2201, 6.0
      %v2226 = vmin.f32 %v2202, 6.0
      %v2227 = vmin.f32 %v2203, 6.0
      %v2228 = vmin.f32 %v2204, 6.0
      %v2229 = vmin.f32 %v2205, 6.0
      %v2230 = vmin.f32 %v2206, 6.0
      %v2231 = vmin.f32 %v2207, 6.0
      %v2232 = vmin.f32 %v2208, 6.0
      %v2233 = vmin.f32 %v2209, 6.0
      %v2234 = vmin.f32 %v2210, 6.0
      %v2235 = vmin.f32 %v2211, 6.0
      %v2236 = vmin.f32 %v2212, 6.0
      %v2237 = vmin.f32 %v2213, 6.0
      %v2238 = vmin.f32 %v2214, 6.0
      %v2239 = vmin.f32 %v2215, 6.0
      %v2240 = vmin.f32 %v2216, 6.0
      %v2241 = vmin.f32 %v2217, 6.0
      %v2242 = vmin.f32 %v2218, 6.0
      %v2243 = vmin.f32 %v2219, 6.0
      %v2244 = vmin.f32 %v2220, 6.0
      %v2245 = vmin.f32 %v2221, 6.0
      %v2246 = vmin.f32 %v2222, 6.0
      %v2247 = vmin.f32 %v2223, 6.0
      %v2248 = vmin.f32 %v2224, 6.0
      %v2249 = vpack.c.bf16 %v2227, %v2225
      %v2250 = vpack.c.bf16 %v2228, %v2226
      %v2251 = vpack.c.bf16 %v2231, %v2229
      %v2252 = vpack.c.bf16 %v2232, %v2230
      %v2253 = vpack.c.bf16 %v2235, %v2233
      %v2254 = vpack.c.bf16 %v2236, %v2234
      %v2255 = vpack.c.bf16 %v2239, %v2237
      %v2256 = vpack.c.bf16 %v2240, %v2238
      %v2257 = vpack.c.bf16 %v2243, %v2241
      %v2258 = vpack.c.bf16 %v2244, %v2242
      %v2259 = vpack.c.bf16 %v2247, %v2245
      %v2260 = vpack.c.bf16 %v2248, %v2246
      %v2293 = vunpack.c.l.b16 %v1845
      %v2294 = vunpack.c.l.b16 %v1846
      %v2295 = vunpack.c.l.b16 %v1847
      %v2296 = vunpack.c.l.b16 %v1848
      %v2297 = vunpack.c.l.b16 %v1849
      %v2298 = vunpack.c.l.b16 %v1850
      %v2299 = vunpack.c.l.b16 %v1851
      %v2300 = vunpack.c.l.b16 %v1852
      %v2301 = vunpack.c.l.b16 %v1853
      %v2302 = vunpack.c.l.b16 %v1854
      %v2303 = vunpack.c.l.b16 %v1855
      %v2304 = vunpack.c.l.b16 %v1856
      %v2305 = vunpack.c.l.b16 %v1857
      %v2306 = vunpack.c.l.b16 %v1858
      %v2307 = vunpack.c.l.b16 %v1859
      %v2308 = vunpack.c.l.b16 %v1860
      %v2309 = vunpack.c.l.b16 %v1861
      %v2310 = vunpack.c.l.b16 %v1862
      %v2311 = vunpack.c.l.b16 %v1863
      %v2312 = vunpack.c.l.b16 %v1864
      %v2313 = vunpack.c.l.b16 %v1865
      %v2314 = vunpack.c.l.b16 %v1866
      %v2315 = vunpack.c.l.b16 %v1867
      %v2316 = vunpack.c.l.b16 %v1868
      %v2317 = vunpack.c.l.b16 %v1869
      %v2318 = vunpack.c.l.b16 %v1870
      %v2319 = vunpack.c.l.b16 %v1871
      %v2320 = vunpack.c.l.b16 %v1872
      %v2321 = vunpack.c.l.b16 %v1873
      %v2322 = vunpack.c.l.b16 %v1874
      %v2323 = vunpack.c.l.b16 %v1875
      %v2324 = vunpack.c.l.b16 %v1876
      %v2325 = vpack.c.b16 %v2294, %v2293
      %v2326 = vpack.c.b16 %v2296, %v2295
      %v2327 = vpack.c.b16 %v2298, %v2297
      %v2328 = vpack.c.b16 %v2300, %v2299
      %v2329 = vpack.c.b16 %v2302, %v2301
      %v2330 = vpack.c.b16 %v2304, %v2303
      %v2331 = vpack.c.b16 %v2306, %v2305
      %v2332 = vpack.c.b16 %v2308, %v2307
      %v2333 = vpack.c.b16 %v2310, %v2309
      %v2334 = vpack.c.b16 %v2312, %v2311
      %v2335 = vpack.c.b16 %v2314, %v2313
      %v2336 = vpack.c.b16 %v2316, %v2315
      %v2337 = vpack.c.b16 %v2318, %v2317
      %v2338 = vpack.c.b16 %v2320, %v2319
      %v2339 = vpack.c.b16 %v2322, %v2321
      %v2340 = vpack.c.b16 %v2324, %v2323
      %2357 = vmatprep.subr.bf16.mxu0 0
      %2358 = vmatpush1.bf16.msra.mxu0 %v2332
      %2359 = vmatprep.subr.bf16.mxu0 0
      %2360 = vmatpush1.bf16.msra.mxu0 %v2331
      %2361 = vmatprep.subr.bf16.mxu0 0
      %2362 = vmatpush1.bf16.msra.mxu0 %v2330
      %2363 = vmatprep.subr.bf16.mxu0 0
      %2364 = vmatpush1.bf16.msra.mxu0 %v2329
      %2365 = vmatprep.subr.bf16.mxu0 0
      %2366 = vmatpush1.bf16.msra.mxu0 %v2328
      %2367 = vmatprep.subr.bf16.mxu0 0
      %2368 = vmatpush1.bf16.msra.mxu0 %v2327
      %2369 = vmatprep.subr.bf16.mxu0 0
      %2370 = vmatpush1.bf16.msra.mxu0 %v2326
      %2371 = vmatprep.subr.bf16.mxu0 0
      %2372 = vmatpush1.bf16.msra.mxu0 %v2325
      %2373 = vmatprep.subr.bf16.mxu0 0
      %2374 = vmatpush2.bf16.msra.mxu0 %v2340
      %2375 = vmatprep.subr.bf16.mxu0 0
      %2376 = vmatpush2.bf16.msra.mxu0 %v2339
      %2377 = vmatprep.subr.bf16.mxu0 0
      %2378 = vmatpush2.bf16.msra.mxu0 %v2338
      %2379 = vmatprep.subr.bf16.mxu0 0
      %2380 = vmatpush2.bf16.msra.mxu0 %v2337
      %2381 = vmatprep.subr.bf16.mxu0 0
      %2382 = vmatpush2.bf16.msra.mxu0 %v2336
      %2383 = vmatprep.subr.bf16.mxu0 0
      %2384 = vmatpush2.bf16.msra.mxu0 %v2335
      %2385 = vmatprep.subr.bf16.mxu0 0
      %2386 = vmatpush2.bf16.msra.mxu0 %v2334
      %2387 = vmatprep.subr.bf16.mxu0 0
      %2388 = vmatpush2.bf16.msra.mxu0 %v2333
      %2389 = vmatprep.mubr.bf16.mxu0 %v2250
      %2390 = vmatmul.mubr.bf16.gmra.mxu0 %v2249
      %v2391 = vpop.f32.mrf.mxu0
      %v2392 = vadd.f32 0.0, %v2391
      %v2393 = vpop.f32.mrf.mxu0
      %v2394 = vpop.f32.mrf.mxu0
      %v2395 = vadd.f32 0.0, %v2394
      %v2396 = vpop.f32.mrf.mxu0
      %2397 = vmatprep.mubr.bf16.mxu0 %v2252
      %2398 = vmatmul.mubr.bf16.gmra.mxu0 %v2251
      %v2399 = vpop.f32.mrf.mxu0
      %v2400 = vadd.f32 0.0, %v2399
      %v2401 = vpop.f32.mrf.mxu0
      %v2402 = vpop.f32.mrf.mxu0
      %v2403 = vadd.f32 0.0, %v2402
      %v2404 = vpop.f32.mrf.mxu0
      %2405 = vmatprep.mubr.bf16.mxu0 %v2254
      %2406 = vmatmul.mubr.bf16.gmra.mxu0 %v2253
      %v2407 = vpop.f32.mrf.mxu0
      %v2408 = vadd.f32 0.0, %v2407
      %v2409 = vpop.f32.mrf.mxu0
      %v2410 = vpop.f32.mrf.mxu0
      %v2411 = vadd.f32 0.0, %v2410
      %v2412 = vpop.f32.mrf.mxu0
      %2413 = vmatprep.mubr.bf16.mxu0 %v2256
      %2414 = vmatmul.mubr.bf16.gmra.mxu0 %v2255
      %v2415 = vpop.f32.mrf.mxu0
      %v2416 = vadd.f32 0.0, %v2415
      %v2417 = vpop.f32.mrf.mxu0
      %v2418 = vpop.f32.mrf.mxu0
      %v2419 = vadd.f32 0.0, %v2418
      %v2420 = vpop.f32.mrf.mxu0
      %2421 = vmatprep.mubr.bf16.mxu0 %v2258
      %2422 = vmatmul.mubr.bf16.gmra.mxu0 %v2257
      %v2423 = vpop.f32.mrf.mxu0
      %v2424 = vadd.f32 0.0, %v2423
      %v2425 = vpop.f32.mrf.mxu0
      %v2426 = vpop.f32.mrf.mxu0
      %v2427 = vadd.f32 0.0, %v2426
      %v2428 = vpop.f32.mrf.mxu0
      %2429 = vmatprep.mubr.bf16.mxu0 %v2260
      %2430 = vmatmul.mubr.bf16.gmra.mxu0 %v2259
      %v2431 = vpop.f32.mrf.mxu0
      %v2432 = vadd.f32 0.0, %v2431
      %v2433 = vpop.f32.mrf.mxu0
      %v2434 = vpop.f32.mrf.mxu0
      %v2435 = vadd.f32 0.0, %v2434
      %v2436 = vpop.f32.mrf.mxu0
      %2437 = vdwg.mxu0
      %vm2438 = vcmask 64512
      %2439 = vst.msk [vmem:[%s377] sm:$0xff] %vm2438, %v2392
      %2440 = vst.msk [vmem:[%s377 + $0x8] sm:$0xff] %vm2438, %v2395
      %2441 = vst.msk [vmem:[%s377 + $0x10] sm:$0xff] %vm2438, %v2400
      %2442 = vst.msk [vmem:[%s377 + $0x18] sm:$0xff] %vm2438, %v2403
      %2443 = vst.msk [vmem:[%s377 + $0x20] sm:$0xff] %vm2438, %v2408
      %2444 = vst.msk [vmem:[%s377 + $0x28] sm:$0xff] %vm2438, %v2411
      %2445 = vst.msk [vmem:[%s377 + $0x30] sm:$0xff] %vm2438, %v2416
      %2446 = vst.msk [vmem:[%s377 + $0x38] sm:$0xff] %vm2438, %v2419
      %2447 = vst.msk [vmem:[%s377 + $0x40] sm:$0xff] %vm2438, %v2424
      %2448 = vst.msk [vmem:[%s377 + $0x48] sm:$0xff] %vm2438, %v2427
      %2449 = vst.msk [vmem:[%s377 + $0x50] sm:$0xff] %vm2438, %v2432
      %2450 = vst.msk [vmem:[%s377 + $0x58] sm:$0xff] %vm2438, %v2435
      %v2455 = vunpack.c.l.b16 %v1808
      %v2456 = vunpack.c.h.b16 %v1808
      %v2457 = vunpack.c.l.b16 %v1809
      %v2458 = vunpack.c.h.b16 %v1809
      %v2459 = vunpack.c.l.b16 %v1810
      %v2460 = vunpack.c.h.b16 %v1810
      %v2461 = vunpack.c.l.b16 %v1811
      %v2462 = vunpack.c.h.b16 %v1811
      %v2463 = vpack.c.b16 %v2457, %v2455
      %v2464 = vpack.c.b16 %v2458, %v2456
      %v2465 = vpack.c.b16 %v2461, %v2459
      %v2466 = vpack.c.b16 %v2462, %v2460
      %2471 = vmatprep.subr.bf16.mxu0 %v2059
      %2472 = vmatpush1.bf16.msra.mxu0 %v2058
      %2473 = vmatprep.subr.bf16.mxu0 %v2057
      %2474 = vmatpush1.bf16.msra.mxu0 %v2056
      %2475 = vmatprep.subr.bf16.mxu0 %v2055
      %2476 = vmatpush1.bf16.msra.mxu0 %v2054
      %2477 = vmatprep.subr.bf16.mxu0 %v2053
      %2478 = vmatpush1.bf16.msra.mxu0 %v2052
      %2479 = vmatprep.subr.bf16.mxu0 %v2051
      %2480 = vmatpush1.bf16.msra.mxu0 %v2050
      %2481 = vmatprep.subr.bf16.mxu0 %v2049
      %2482 = vmatpush1.bf16.msra.mxu0 %v2048
      %2483 = vmatprep.subr.bf16.mxu0 %v2047
      %2484 = vmatpush1.bf16.msra.mxu0 %v2046
      %2485 = vmatprep.subr.bf16.mxu0 %v2045
      %2486 = vmatpush1.bf16.msra.mxu0 %v2044
      %2487 = vmatprep.subr.bf16.mxu0 %v2075
      %2488 = vmatpush2.bf16.msra.mxu0 %v2074
      %2489 = vmatprep.subr.bf16.mxu0 %v2073
      %2490 = vmatpush2.bf16.msra.mxu0 %v2072
      %2491 = vmatprep.subr.bf16.mxu0 %v2071
      %2492 = vmatpush2.bf16.msra.mxu0 %v2070
      %2493 = vmatprep.subr.bf16.mxu0 %v2069
      %2494 = vmatpush2.bf16.msra.mxu0 %v2068
      %2495 = vmatprep.subr.bf16.mxu0 %v2067
      %2496 = vmatpush2.bf16.msra.mxu0 %v2066
      %2497 = vmatprep.subr.bf16.mxu0 %v2065
      %2498 = vmatpush2.bf16.msra.mxu0 %v2064
      %2499 = vmatprep.subr.bf16.mxu0 %v2063
      %2500 = vmatpush2.bf16.msra.mxu0 %v2062
      %2501 = vmatprep.subr.bf16.mxu0 %v2061
      %2502 = vmatpush2.bf16.msra.mxu0 %v2060
      %2503 = vmatprep.mubr.bf16.mxu0 %v2464
      %2504 = vmatmul.mubr.bf16.gmra.mxu0 %v2463
      %v2505 = vpop.f32.mrf.mxu0
      %v2506 = vadd.f32 %v1881, %v2505
      %v2507 = vpop.f32.mrf.mxu0
      %v2508 = vadd.f32 %v1885, %v2507
      %v2509 = vpop.f32.mrf.mxu0
      %v2510 = vadd.f32 %v1881, %v2509
      %v2511 = vpop.f32.mrf.mxu0
      %v2512 = vadd.f32 %v1885, %v2511
      %2513 = vmatprep.mubr.bf16.mxu0 %v2466
      %2514 = vmatmul.mubr.bf16.gmra.mxu0 %v2465
      %v2515 = vpop.f32.mrf.mxu0
      %v2516 = vadd.f32 %v1881, %v2515
      %v2517 = vpop.f32.mrf.mxu0
      %v2518 = vadd.f32 %v1885, %v2517
      %v2519 = vpop.f32.mrf.mxu0
      %v2520 = vadd.f32 %v1881, %v2519
      %v2521 = vpop.f32.mrf.mxu0
      %v2522 = vadd.f32 %v1885, %v2521
      %2523 = vdwg.mxu0
      %v2524 = vmax.f32 %v2506, 0.0
      %v2525 = vmax.f32 %v2508, 0.0
      %v2526 = vmax.f32 %v2510, 0.0
      %v2527 = vmax.f32 %v2512, 0.0
      %v2528 = vmax.f32 %v2516, 0.0
      %v2529 = vmax.f32 %v2518, 0.0
      %v2530 = vmax.f32 %v2520, 0.0
      %v2531 = vmax.f32 %v2522, 0.0
      %v2532 = vmin.f32 %v2524, 6.0
      %v2533 = vmin.f32 %v2525, 6.0
      %v2534 = vmin.f32 %v2526, 6.0
      %v2535 = vmin.f32 %v2527, 6.0
      %v2536 = vmin.f32 %v2528, 6.0
      %v2537 = vmin.f32 %v2529, 6.0
      %v2538 = vmin.f32 %v2530, 6.0
      %v2539 = vmin.f32 %v2531, 6.0
      %v2540 = vpack.c.bf16 %v2534, %v2532
      %v2541 = vpack.c.bf16 %v2535, %v2533
      %v2542 = vpack.c.bf16 %v2538, %v2536
      %v2543 = vpack.c.bf16 %v2539, %v2537
      %2544 = vmatprep.subr.bf16.mxu0 0
      %2545 = vmatpush1.bf16.msra.mxu0 %v2332
      %2546 = vmatprep.subr.bf16.mxu0 0
      %2547 = vmatpush1.bf16.msra.mxu0 %v2331
      %2548 = vmatprep.subr.bf16.mxu0 0
      %2549 = vmatpush1.bf16.msra.mxu0 %v2330
      %2550 = vmatprep.subr.bf16.mxu0 0
      %2551 = vmatpush1.bf16.msra.mxu0 %v2329
      %2552 = vmatprep.subr.bf16.mxu0 0
      %2553 = vmatpush1.bf16.msra.mxu0 %v2328
      %2554 = vmatprep.subr.bf16.mxu0 0
      %2555 = vmatpush1.bf16.msra.mxu0 %v2327
      %2556 = vmatprep.subr.bf16.mxu0 0
      %2557 = vmatpush1.bf16.msra.mxu0 %v2326
      %2558 = vmatprep.subr.bf16.mxu0 0
      %2559 = vmatpush1.bf16.msra.mxu0 %v2325
      %2560 = vmatprep.subr.bf16.mxu0 0
      %2561 = vmatpush2.bf16.msra.mxu0 %v2340
      %2562 = vmatprep.subr.bf16.mxu0 0
      %2563 = vmatpush2.bf16.msra.mxu0 %v2339
      %2564 = vmatprep.subr.bf16.mxu0 0
      %2565 = vmatpush2.bf16.msra.mxu0 %v2338
      %2566 = vmatprep.subr.bf16.mxu0 0
      %2567 = vmatpush2.bf16.msra.mxu0 %v2337
      %2568 = vmatprep.subr.bf16.mxu0 0
      %2569 = vmatpush2.bf16.msra.mxu0 %v2336
      %2570 = vmatprep.subr.bf16.mxu0 0
      %2571 = vmatpush2.bf16.msra.mxu0 %v2335
      %2572 = vmatprep.subr.bf16.mxu0 0
      %2573 = vmatpush2.bf16.msra.mxu0 %v2334
      %2574 = vmatprep.subr.bf16.mxu0 0
      %2575 = vmatpush2.bf16.msra.mxu0 %v2333
      %2576 = vmatprep.mubr.bf16.mxu0 %v2541
      %2577 = vmatmul.mubr.bf16.gmra.mxu0 %v2540
      %v2578 = vpop.f32.mrf.mxu0
      %v2579 = vadd.f32 0.0, %v2578
      %v2580 = vpop.f32.mrf.mxu0
      %v2581 = vpop.f32.mrf.mxu0
      %v2582 = vadd.f32 0.0, %v2581
      %v2583 = vpop.f32.mrf.mxu0
      %2584 = vmatprep.mubr.bf16.mxu0 %v2543
      %2585 = vmatmul.mubr.bf16.gmra.mxu0 %v2542
      %v2586 = vpop.f32.mrf.mxu0
      %v2587 = vadd.f32 0.0, %v2586
      %v2588 = vpop.f32.mrf.mxu0
      %v2589 = vpop.f32.mrf.mxu0
      %v2590 = vadd.f32 0.0, %v2589
      %v2591 = vpop.f32.mrf.mxu0
      %2592 = vdwg.mxu0
      %s2593 = scalar_lea.vmem %s377, 96
      %2594 = vst.msk [vmem:[%s2593] sm:$0xff] %vm2438, %v2579
      %2595 = vst.msk [vmem:[%s2593 + $0x8] sm:$0xff] %vm2438, %v2582
      %2596 = vst.msk [vmem:[%s2593 + $0x10] sm:$0xff] %vm2438, %v2587
      %2597 = vst.msk [vmem:[%s2593 + $0x18] sm:$0xff] %vm2438, %v2590
      %s2598 = smul.u32 8, %s22
      %p2599 = scmp.lt.s32.totalorder %s21, 1
      %s2600 = scalar_select %p2599, %s21, 1
      %p2601 = scmp.lt.s32.totalorder %s2598, 15
      %s2602 = scalar_select %p2601, %s2598, 15
      %s2603 = smul.addr %s2602, 2
      %s2604 = smul.addr %s2600, 32
      %s2605 = sadd.s32 %s2603, %s2604
      %s2606 = smul.addr %s2605, 8
      %s2607 = scalar_lea.vmem %s6, %s2606
      // Predicated region
      $region45: #{maf_forward.1} parent=43 // pred_check
        %p2608 = pneg %p193
      $region46: #{maf_forward.1} parent=43 // pred_check_branch
        %2610 = sbr.rel (%p2608) target = $region48
      $region47: #{maf_forward.1} parent=43 // pred_region
        %s2611 = smul.u32 8, %s22
      $region48: #{maf_forward.1} parent=43 // pred_fallthru
        _
    $region44: #{maf_forward.1} parent=5 // pred_fallthru
      _
    %p2612 = scmp.le.s32.totalorder 2, %s12
    // Predicated region
    $region49: #{maf_forward.1} parent=5 // pred_check
      %p2613 = pneg %p2612
    $region50: #{maf_forward.1} parent=5 // pred_check_branch
      %2615 = sbr.rel (%p2613) target = $region52
    $region51: #{maf_forward.1} parent=5 // pred_region
      %s2616 = ssub.s32 %s12, 2
      // Predicated region
      $region53: #{maf_forward.1} parent=51 // pred_check
        %p2617 = pneg %p199
      $region54: #{maf_forward.1} parent=51 // pred_check_branch
        %2619 = sbr.rel (%p2617) target = $region56
      $region55: #{maf_forward.1} parent=51 // pred_region
        %s2620 = smul.u32 8, %s24
        %p2621 = scmp.lt.s32.totalorder %s23, 1
        %s2622 = scalar_select %p2621, %s23, 1
        %p2623 = scmp.lt.s32.totalorder %s2620, 15
        %s2624 = scalar_select %p2623, %s2620, 15
        %s2625 = smul.addr %s2624, 2
        %s2626 = smul.addr %s2622, 32
        %s2627 = sadd.s32 %s2625, %s2626
        %s2628 = smul.addr %s2627, 8
        %s2629 = scalar_lea.vmem %s6, %s2628
      $region56: #{maf_forward.1} parent=51 // pred_fallthru
        _
    $region52: #{maf_forward.1} parent=5 // pred_fallthru
      _
  $region6: #{maf_forward.1} parent=0 // loop_footer
    %s16 = sadd.s32 1, %s12
  $region7: #{maf_forward.1} parent=0 // loop_footer_branch
    %11 = sbr.rel target = $region3
  $region8: #{maf_forward.1} parent=0 // loop_exit
    _

</llo_original>
